<compile_context>
chip_gen: v7x
topology: tpu7x:2x2x1
jax: 0.10.0
libtpu: 0.0.40
codegen_flags: <defaults>
</compile_context>

<pallas_src>
import jax
import jax.numpy as jnp
from jax import lax
from jax.experimental import pallas as pl
from jax.experimental.pallas import tpu as pltpu

# ----------------------------- config ---------------------------------------
SEQ = 8            # max_length analogue (tiny)
HIDDEN = 32        # bert hidden size analogue
NUM_HEADS = 2
HEAD_DIM = HIDDEN // NUM_HEADS
FFN = 64
LAYERS = 2
VOCAB = 64
LN_EPS = 1e-12
COS_EPS = 1e-8     # torch.nn.CosineSimilarity default eps
TOTAL = 2 * SEQ    # both texts stacked on sublanes
LANE = 128         # lane padding of the packed small-vector slab

# packed small-vector slab layout (one lane-padded row per tiny parameter)
ROW_EMB_G, ROW_EMB_B, ROW_POOL_B = 0, 1, 2
ROWS_PER_LAYER = 8
R_BQKV, R_BO, R_B1, R_B2, R_LN1G, R_LN1B, R_LN2G, R_LN2B = range(ROWS_PER_LAYER)
VEC_ROWS = 3 + ROWS_PER_LAYER * LAYERS


# ----------------------------- fused kernel ---------------------------------
def _layernorm(x, g, b, eps=LN_EPS):
    mean = jnp.mean(x, axis=-1, keepdims=True)
    xc = x - mean
    var = jnp.mean(xc * xc, axis=-1, keepdims=True)
    return xc * lax.rsqrt(var + eps) * g + b


def encoder_cosine_kernel(ids_a_ref, ids_b_ref, tok_emb_ref, pos_emb_ref,
                          wqkv_ref, wo_ref, w1_ref, w2_ref, pool_w_ref,
                          vec_ref, o_ref, x_scr):
    def vrow(row, width):
        # static slice of the packed small-vector slab -> (1, width)
        return vec_ref[row:row + 1, 0:width]

    # ---- token-embedding gather: SMEM ids -> dynamic leading-dim reads ----
    # tok_emb table is (VOCAB, 1, HIDDEN) so the dynamic index is on the
    # untiled leading axis; both texts land in one (TOTAL, HIDDEN) slab.
    for i in range(SEQ):
        x_scr[i:i + 1, :] = tok_emb_ref[ids_a_ref[i]]
        x_scr[SEQ + i:SEQ + i + 1, :] = tok_emb_ref[ids_b_ref[i]]

    # positional embeddings (pre-tiled for both texts) + embedding LayerNorm
    x = _layernorm(x_scr[...] + pos_emb_ref[...],
                   vrow(ROW_EMB_G, HIDDEN), vrow(ROW_EMB_B, HIDDEN))

    # block-diagonal attention mask: text A rows attend only to text A cols.
    r = lax.broadcasted_iota(jnp.int32, (TOTAL, TOTAL), 0)
    c = lax.broadcasted_iota(jnp.int32, (TOTAL, TOTAL), 1)
    neg_mask = jnp.where((r < SEQ) == (c < SEQ), 0.0, -1e30).astype(jnp.float32)

    scale = 1.0 / (HEAD_DIM ** 0.5)

    # ---- transformer layers (statically unrolled, all weights in VMEM) ----
    for li in range(LAYERS):
        base = 3 + li * ROWS_PER_LAYER
        wqkv = wqkv_ref[li]                       # (HIDDEN, 3*HIDDEN)
        wo = wo_ref[li]                           # (HIDDEN, HIDDEN)

        # fused QKV projection for both texts at once: (TOTAL, 3*HIDDEN)
        qkv = jnp.dot(x, wqkv, preferred_element_type=jnp.float32)
        qkv = qkv + vrow(base + R_BQKV, 3 * HIDDEN)

        # multi-head attention; accumulate the output projection per head
        # (no lane concat of head contexts).
        attn = None
        for h in range(NUM_HEADS):
            lo = h * HEAD_DIM
            qh = qkv[:, lo:lo + HEAD_DIM]
            kh = qkv[:, HIDDEN + lo:HIDDEN + lo + HEAD_DIM]
            vh = qkv[:, 2 * HIDDEN + lo:2 * HIDDEN + lo + HEAD_DIM]
            # q @ k^T with both contractions on the last dim -> no transpose op
            s = lax.dot_general(qh, kh, (((1,), (1,)), ((), ())),
                                preferred_element_type=jnp.float32)
            s = s * scale + neg_mask
            s = s - jnp.max(s, axis=-1, keepdims=True)
            p = jnp.exp(s)
            p = p * pl.reciprocal(jnp.sum(p, axis=-1, keepdims=True),
                                  approx=True)
            ctx_h = jnp.dot(p, vh, preferred_element_type=jnp.float32)
            part = jnp.dot(ctx_h, wo[lo:lo + HEAD_DIM, :],
                           preferred_element_type=jnp.float32)
            attn = part if attn is None else attn + part
        attn = attn + vrow(base + R_BO, HIDDEN)
        x = _layernorm(x + attn,
                       vrow(base + R_LN1G, HIDDEN), vrow(base + R_LN1B, HIDDEN))

        # FFN (tanh-approx GELU) + residual + LN2
        h1 = jnp.dot(x, w1_ref[li], preferred_element_type=jnp.float32)
        h1 = jax.nn.gelu(h1 + vrow(base + R_B1, FFN))
        h2 = jnp.dot(h1, w2_ref[li], preferred_element_type=jnp.float32)
        h2 = h2 + vrow(base + R_B2, HIDDEN)
        x = _layernorm(x + h2,
                       vrow(base + R_LN2G, HIDDEN), vrow(base + R_LN2B, HIDDEN))

    # ---- BERT pooler: tanh(W @ CLS + b), applied to the whole slab ----
    pooled = jnp.tanh(
        jnp.dot(x, pool_w_ref[...], preferred_element_type=jnp.float32)
        + vrow(ROW_POOL_B, HIDDEN))
    a = pooled[0:1, :]            # CLS of text A (row 0)
    b = pooled[SEQ:SEQ + 1, :]    # CLS of text B (row SEQ)

    # ---- cosine-similarity epilogue (was a second pallas_call before) ----
    dot_ab = jnp.sum(a * b, axis=-1, keepdims=True)
    na = jnp.sqrt(jnp.sum(a * a, axis=-1, keepdims=True))
    nb = jnp.sqrt(jnp.sum(b * b, axis=-1, keepdims=True))
    o_ref[...] = dot_ab / jnp.maximum(na * nb, COS_EPS)


# ----------------------------- wrapper ---------------------------------------
def similarity_call(ids_a, ids_b, params):
    smem = pl.BlockSpec(memory_space=pltpu.MemorySpace.SMEM)
    vmem = pl.BlockSpec(memory_space=pltpu.MemorySpace.VMEM)
    return pl.pallas_call(
        encoder_cosine_kernel,
        out_shape=jax.ShapeDtypeStruct((1, 1), jnp.float32),
        in_specs=[smem, smem] + [vmem] * 8,
        out_specs=vmem,
        scratch_shapes=[pltpu.VMEM((TOTAL, HIDDEN), jnp.float32)],
    )(
        ids_a.astype(jnp.int32), ids_b.astype(jnp.int32),
        params["tok_emb"], params["pos_emb"],
        params["wqkv"], params["wo"], params["w1"], params["w2"],
        params["pool_w"], params["vec"],
    )


@jax.jit
def text_similarity(token_ids_a, token_ids_b, params):
    out = similarity_call(token_ids_a, token_ids_b, params)   # (1, 1)
    return out[0, 0]


# ----------------------------- params (synthetic "pretrained" weights) -------
def init_params(key):
    def nrm(k, shape):
        return (0.02 * jax.random.normal(k, shape)).astype(jnp.float32)

    keys = jax.random.split(key, 7)

    # packed small-vector slab: one lane-padded row per tiny parameter
    # (biases are zero, LayerNorm gammas are one — set explicitly to show how
    # a real checkpoint would be packed).
    vec = jnp.zeros((VEC_ROWS, LANE), jnp.float32)
    vec = vec.at[ROW_EMB_G, :HIDDEN].set(1.0)          # embedding LN gamma
    for li in range(LAYERS):
        base = 3 + li * ROWS_PER_LAYER
        vec = vec.at[base + R_LN1G, :HIDDEN].set(1.0)  # LN1 gamma
        vec = vec.at[base + R_LN2G, :HIDDEN].set(1.0)  # LN2 gamma

    pos = nrm(keys[1], (SEQ, HIDDEN))
    return {
        # (VOCAB, 1, HIDDEN): dynamic gather indexes the untiled leading axis
        "tok_emb": nrm(keys[0], (VOCAB, HIDDEN)).reshape(VOCAB, 1, HIDDEN),
        # pre-tiled for the two stacked texts -> (2*SEQ, HIDDEN)
        "pos_emb": jnp.concatenate([pos, pos], axis=0),
        "wqkv": nrm(keys[2], (LAYERS, HIDDEN, 3 * HIDDEN)),
        "wo": nrm(keys[3], (LAYERS, HIDDEN, HIDDEN)),
        "w1": nrm(keys[4], (LAYERS, HIDDEN, FFN)),
        "w2": nrm(keys[5], (LAYERS, FFN, HIDDEN)),
        "pool_w": nrm(keys[6], (HIDDEN, HIDDEN)),
        "vec": vec,
    }


# ----------------------------- main ------------------------------------------
if __name__ == "__main__":
    key = jax.random.PRNGKey(0)
    k_param, k_a, k_b = jax.random.split(key, 3)

    params = init_params(k_param)

    # synthetic "tokenized" sequences for text_a / text_b
    token_ids_a = jax.random.randint(k_a, (SEQ,), 0, VOCAB, dtype=jnp.int32)
    token_ids_b = jax.random.randint(k_b, (SEQ,), 0, VOCAB, dtype=jnp.int32)

    score = text_similarity(token_ids_a, token_ids_b, params)
    score = jax.block_until_ready(score)
    similarity = float(score)  # .item() analogue

    assert -1.0 - 1e-5 <= similarity <= 1.0 + 1e-5
    print("KERNEL_OK")
</pallas_src>

<mosaic_0001>
module attributes {stable_mosaic.version = 11 : i64} {
  func.func @encoder_cosine_kernel(%arg0: memref<8xi32, #tpu.memory_space<smem>>, %arg1: memref<8xi32, #tpu.memory_space<smem>>, %arg2: memref<64x1x32xf32, #tpu.memory_space<vmem>>, %arg3: memref<16x32xf32, #tpu.memory_space<vmem>>, %arg4: memref<2x32x96xf32, #tpu.memory_space<vmem>>, %arg5: memref<2x32x32xf32, #tpu.memory_space<vmem>>, %arg6: memref<2x32x64xf32, #tpu.memory_space<vmem>>, %arg7: memref<2x64x32xf32, #tpu.memory_space<vmem>>, %arg8: memref<32x32xf32, #tpu.memory_space<vmem>>, %arg9: memref<19x128xf32, #tpu.memory_space<vmem>>, %arg10: memref<1x1xf32, #tpu.memory_space<vmem>>, %arg11: memref<16x32xf32, #tpu.memory_space<vmem>>) attributes {dimension_semantics = [], scalar_prefetch = 0 : i64, scratch_operands = 1 : i64, tpu.core_type = #tpu.core_type<tc>} {
    %c0 = arith.constant 0 : index
    %0 = memref.load %arg0[%c0] : memref<8xi32, #tpu.memory_space<smem>>
    %1 = arith.index_cast %0 : i32 to index
    %c0_0 = arith.constant 0 : index
    %c0_1 = arith.constant 0 : index
    %2 = vector.load %arg2[%1, %c0_0, %c0_1] : memref<64x1x32xf32, #tpu.memory_space<vmem>>, vector<1x1x32xf32>
    %3 = vector.shape_cast %2 : vector<1x1x32xf32> to vector<1x32xf32>
    %c0_2 = arith.constant 0 : index
    %c0_3 = arith.constant 0 : index
    %4 = vector.load %arg11[%c0_2, %c0_3] : memref<16x32xf32, #tpu.memory_space<vmem>>, vector<1x32xf32>
    tpu.vector_store %arg11[%c0_2, %c0_3], %3 {strides = array<i32>} : memref<16x32xf32, #tpu.memory_space<vmem>>, vector<1x32xf32>,
    %c0_4 = arith.constant 0 : index
    %5 = memref.load %arg1[%c0_4] : memref<8xi32, #tpu.memory_space<smem>>
    %6 = arith.index_cast %5 : i32 to index
    %c0_5 = arith.constant 0 : index
    %c0_6 = arith.constant 0 : index
    %7 = vector.load %arg2[%6, %c0_5, %c0_6] : memref<64x1x32xf32, #tpu.memory_space<vmem>>, vector<1x1x32xf32>
    %8 = vector.shape_cast %7 : vector<1x1x32xf32> to vector<1x32xf32>
    %c8 = arith.constant 8 : index
    %c0_7 = arith.constant 0 : index
    %9 = vector.load %arg11[%c8, %c0_7] : memref<16x32xf32, #tpu.memory_space<vmem>>, vector<1x32xf32>
    tpu.vector_store %arg11[%c8, %c0_7], %8 {strides = array<i32>} : memref<16x32xf32, #tpu.memory_space<vmem>>, vector<1x32xf32>,
    %c1 = arith.constant 1 : index
    %10 = memref.load %arg0[%c1] : memref<8xi32, #tpu.memory_space<smem>>
    %11 = arith.index_cast %10 : i32 to index
    %c0_8 = arith.constant 0 : index
    %c0_9 = arith.constant 0 : index
    %12 = vector.load %arg2[%11, %c0_8, %c0_9] : memref<64x1x32xf32, #tpu.memory_space<vmem>>, vector<1x1x32xf32>
    %13 = vector.shape_cast %12 : vector<1x1x32xf32> to vector<1x32xf32>
    %c1_10 = arith.constant 1 : index
    %c0_11 = arith.constant 0 : index
    %14 = vector.load %arg11[%c1_10, %c0_11] : memref<16x32xf32, #tpu.memory_space<vmem>>, vector<1x32xf32>
    tpu.vector_store %arg11[%c1_10, %c0_11], %13 {strides = array<i32>} : memref<16x32xf32, #tpu.memory_space<vmem>>, vector<1x32xf32>,
    %c1_12 = arith.constant 1 : index
    %15 = memref.load %arg1[%c1_12] : memref<8xi32, #tpu.memory_space<smem>>
    %16 = arith.index_cast %15 : i32 to index
    %c0_13 = arith.constant 0 : index
    %c0_14 = arith.constant 0 : index
    %17 = vector.load %arg2[%16, %c0_13, %c0_14] : memref<64x1x32xf32, #tpu.memory_space<vmem>>, vector<1x1x32xf32>
    %18 = vector.shape_cast %17 : vector<1x1x32xf32> to vector<1x32xf32>
    %c9 = arith.constant 9 : index
    %c0_15 = arith.constant 0 : index
    %19 = vector.load %arg11[%c9, %c0_15] : memref<16x32xf32, #tpu.memory_space<vmem>>, vector<1x32xf32>
    tpu.vector_store %arg11[%c9, %c0_15], %18 {strides = array<i32>} : memref<16x32xf32, #tpu.memory_space<vmem>>, vector<1x32xf32>,
    %c2 = arith.constant 2 : index
    %20 = memref.load %arg0[%c2] : memref<8xi32, #tpu.memory_space<smem>>
    %21 = arith.index_cast %20 : i32 to index
    %c0_16 = arith.constant 0 : index
    %c0_17 = arith.constant 0 : index
    %22 = vector.load %arg2[%21, %c0_16, %c0_17] : memref<64x1x32xf32, #tpu.memory_space<vmem>>, vector<1x1x32xf32>
    %23 = vector.shape_cast %22 : vector<1x1x32xf32> to vector<1x32xf32>
    %c2_18 = arith.constant 2 : index
    %c0_19 = arith.constant 0 : index
    %24 = vector.load %arg11[%c2_18, %c0_19] : memref<16x32xf32, #tpu.memory_space<vmem>>, vector<1x32xf32>
    tpu.vector_store %arg11[%c2_18, %c0_19], %23 {strides = array<i32>} : memref<16x32xf32, #tpu.memory_space<vmem>>, vector<1x32xf32>,
    %c2_20 = arith.constant 2 : index
    %25 = memref.load %arg1[%c2_20] : memref<8xi32, #tpu.memory_space<smem>>
    %26 = arith.index_cast %25 : i32 to index
    %c0_21 = arith.constant 0 : index
    %c0_22 = arith.constant 0 : index
    %27 = vector.load %arg2[%26, %c0_21, %c0_22] : memref<64x1x32xf32, #tpu.memory_space<vmem>>, vector<1x1x32xf32>
    %28 = vector.shape_cast %27 : vector<1x1x32xf32> to vector<1x32xf32>
    %c10 = arith.constant 10 : index
    %c0_23 = arith.constant 0 : index
    %29 = vector.load %arg11[%c10, %c0_23] : memref<16x32xf32, #tpu.memory_space<vmem>>, vector<1x32xf32>
    tpu.vector_store %arg11[%c10, %c0_23], %28 {strides = array<i32>} : memref<16x32xf32, #tpu.memory_space<vmem>>, vector<1x32xf32>,
    %c3 = arith.constant 3 : index
    %30 = memref.load %arg0[%c3] : memref<8xi32, #tpu.memory_space<smem>>
    %31 = arith.index_cast %30 : i32 to index
    %c0_24 = arith.constant 0 : index
    %c0_25 = arith.constant 0 : index
    %32 = vector.load %arg2[%31, %c0_24, %c0_25] : memref<64x1x32xf32, #tpu.memory_space<vmem>>, vector<1x1x32xf32>
    %33 = vector.shape_cast %32 : vector<1x1x32xf32> to vector<1x32xf32>
    %c3_26 = arith.constant 3 : index
    %c0_27 = arith.constant 0 : index
    %34 = vector.load %arg11[%c3_26, %c0_27] : memref<16x32xf32, #tpu.memory_space<vmem>>, vector<1x32xf32>
    tpu.vector_store %arg11[%c3_26, %c0_27], %33 {strides = array<i32>} : memref<16x32xf32, #tpu.memory_space<vmem>>, vector<1x32xf32>,
    %c3_28 = arith.constant 3 : index
    %35 = memref.load %arg1[%c3_28] : memref<8xi32, #tpu.memory_space<smem>>
    %36 = arith.index_cast %35 : i32 to index
    %c0_29 = arith.constant 0 : index
    %c0_30 = arith.constant 0 : index
    %37 = vector.load %arg2[%36, %c0_29, %c0_30] : memref<64x1x32xf32, #tpu.memory_space<vmem>>, vector<1x1x32xf32>
    %38 = vector.shape_cast %37 : vector<1x1x32xf32> to vector<1x32xf32>
    %c11 = arith.constant 11 : index
    %c0_31 = arith.constant 0 : index
    %39 = vector.load %arg11[%c11, %c0_31] : memref<16x32xf32, #tpu.memory_space<vmem>>, vector<1x32xf32>
    tpu.vector_store %arg11[%c11, %c0_31], %38 {strides = array<i32>} : memref<16x32xf32, #tpu.memory_space<vmem>>, vector<1x32xf32>,
    %c4 = arith.constant 4 : index
    %40 = memref.load %arg0[%c4] : memref<8xi32, #tpu.memory_space<smem>>
    %41 = arith.index_cast %40 : i32 to index
    %c0_32 = arith.constant 0 : index
    %c0_33 = arith.constant 0 : index
    %42 = vector.load %arg2[%41, %c0_32, %c0_33] : memref<64x1x32xf32, #tpu.memory_space<vmem>>, vector<1x1x32xf32>
    %43 = vector.shape_cast %42 : vector<1x1x32xf32> to vector<1x32xf32>
    %c4_34 = arith.constant 4 : index
    %c0_35 = arith.constant 0 : index
    %44 = vector.load %arg11[%c4_34, %c0_35] : memref<16x32xf32, #tpu.memory_space<vmem>>, vector<1x32xf32>
    tpu.vector_store %arg11[%c4_34, %c0_35], %43 {strides = array<i32>} : memref<16x32xf32, #tpu.memory_space<vmem>>, vector<1x32xf32>,
    %c4_36 = arith.constant 4 : index
    %45 = memref.load %arg1[%c4_36] : memref<8xi32, #tpu.memory_space<smem>>
    %46 = arith.index_cast %45 : i32 to index
    %c0_37 = arith.constant 0 : index
    %c0_38 = arith.constant 0 : index
    %47 = vector.load %arg2[%46, %c0_37, %c0_38] : memref<64x1x32xf32, #tpu.memory_space<vmem>>, vector<1x1x32xf32>
    %48 = vector.shape_cast %47 : vector<1x1x32xf32> to vector<1x32xf32>
    %c12 = arith.constant 12 : index
    %c0_39 = arith.constant 0 : index
    %49 = vector.load %arg11[%c12, %c0_39] : memref<16x32xf32, #tpu.memory_space<vmem>>, vector<1x32xf32>
    tpu.vector_store %arg11[%c12, %c0_39], %48 {strides = array<i32>} : memref<16x32xf32, #tpu.memory_space<vmem>>, vector<1x32xf32>,
    %c5 = arith.constant 5 : index
    %50 = memref.load %arg0[%c5] : memref<8xi32, #tpu.memory_space<smem>>
    %51 = arith.index_cast %50 : i32 to index
    %c0_40 = arith.constant 0 : index
    %c0_41 = arith.constant 0 : index
    %52 = vector.load %arg2[%51, %c0_40, %c0_41] : memref<64x1x32xf32, #tpu.memory_space<vmem>>, vector<1x1x32xf32>
    %53 = vector.shape_cast %52 : vector<1x1x32xf32> to vector<1x32xf32>
    %c5_42 = arith.constant 5 : index
    %c0_43 = arith.constant 0 : index
    %54 = vector.load %arg11[%c5_42, %c0_43] : memref<16x32xf32, #tpu.memory_space<vmem>>, vector<1x32xf32>
    tpu.vector_store %arg11[%c5_42, %c0_43], %53 {strides = array<i32>} : memref<16x32xf32, #tpu.memory_space<vmem>>, vector<1x32xf32>,
    %c5_44 = arith.constant 5 : index
    %55 = memref.load %arg1[%c5_44] : memref<8xi32, #tpu.memory_space<smem>>
    %56 = arith.index_cast %55 : i32 to index
    %c0_45 = arith.constant 0 : index
    %c0_46 = arith.constant 0 : index
    %57 = vector.load %arg2[%56, %c0_45, %c0_46] : memref<64x1x32xf32, #tpu.memory_space<vmem>>, vector<1x1x32xf32>
    %58 = vector.shape_cast %57 : vector<1x1x32xf32> to vector<1x32xf32>
    %c13 = arith.constant 13 : index
    %c0_47 = arith.constant 0 : index
    %59 = vector.load %arg11[%c13, %c0_47] : memref<16x32xf32, #tpu.memory_space<vmem>>, vector<1x32xf32>
    tpu.vector_store %arg11[%c13, %c0_47], %58 {strides = array<i32>} : memref<16x32xf32, #tpu.memory_space<vmem>>, vector<1x32xf32>,
    %c6 = arith.constant 6 : index
    %60 = memref.load %arg0[%c6] : memref<8xi32, #tpu.memory_space<smem>>
    %61 = arith.index_cast %60 : i32 to index
    %c0_48 = arith.constant 0 : index
    %c0_49 = arith.constant 0 : index
    %62 = vector.load %arg2[%61, %c0_48, %c0_49] : memref<64x1x32xf32, #tpu.memory_space<vmem>>, vector<1x1x32xf32>
    %63 = vector.shape_cast %62 : vector<1x1x32xf32> to vector<1x32xf32>
    %c6_50 = arith.constant 6 : index
    %c0_51 = arith.constant 0 : index
    %64 = vector.load %arg11[%c6_50, %c0_51] : memref<16x32xf32, #tpu.memory_space<vmem>>, vector<1x32xf32>
    tpu.vector_store %arg11[%c6_50, %c0_51], %63 {strides = array<i32>} : memref<16x32xf32, #tpu.memory_space<vmem>>, vector<1x32xf32>,
    %c6_52 = arith.constant 6 : index
    %65 = memref.load %arg1[%c6_52] : memref<8xi32, #tpu.memory_space<smem>>
    %66 = arith.index_cast %65 : i32 to index
    %c0_53 = arith.constant 0 : index
    %c0_54 = arith.constant 0 : index
    %67 = vector.load %arg2[%66, %c0_53, %c0_54] : memref<64x1x32xf32, #tpu.memory_space<vmem>>, vector<1x1x32xf32>
    %68 = vector.shape_cast %67 : vector<1x1x32xf32> to vector<1x32xf32>
    %c14 = arith.constant 14 : index
    %c0_55 = arith.constant 0 : index
    %69 = vector.load %arg11[%c14, %c0_55] : memref<16x32xf32, #tpu.memory_space<vmem>>, vector<1x32xf32>
    tpu.vector_store %arg11[%c14, %c0_55], %68 {strides = array<i32>} : memref<16x32xf32, #tpu.memory_space<vmem>>, vector<1x32xf32>,
    %c7 = arith.constant 7 : index
    %70 = memref.load %arg0[%c7] : memref<8xi32, #tpu.memory_space<smem>>
    %71 = arith.index_cast %70 : i32 to index
    %c0_56 = arith.constant 0 : index
    %c0_57 = arith.constant 0 : index
    %72 = vector.load %arg2[%71, %c0_56, %c0_57] : memref<64x1x32xf32, #tpu.memory_space<vmem>>, vector<1x1x32xf32>
    %73 = vector.shape_cast %72 : vector<1x1x32xf32> to vector<1x32xf32>
    %c7_58 = arith.constant 7 : index
    %c0_59 = arith.constant 0 : index
    %74 = vector.load %arg11[%c7_58, %c0_59] : memref<16x32xf32, #tpu.memory_space<vmem>>, vector<1x32xf32>
    tpu.vector_store %arg11[%c7_58, %c0_59], %73 {strides = array<i32>} : memref<16x32xf32, #tpu.memory_space<vmem>>, vector<1x32xf32>,
    %c7_60 = arith.constant 7 : index
    %75 = memref.load %arg1[%c7_60] : memref<8xi32, #tpu.memory_space<smem>>
    %76 = arith.index_cast %75 : i32 to index
    %c0_61 = arith.constant 0 : index
    %c0_62 = arith.constant 0 : index
    %77 = vector.load %arg2[%76, %c0_61, %c0_62] : memref<64x1x32xf32, #tpu.memory_space<vmem>>, vector<1x1x32xf32>
    %78 = vector.shape_cast %77 : vector<1x1x32xf32> to vector<1x32xf32>
    %c15 = arith.constant 15 : index
    %c0_63 = arith.constant 0 : index
    %79 = vector.load %arg11[%c15, %c0_63] : memref<16x32xf32, #tpu.memory_space<vmem>>, vector<1x32xf32>
    tpu.vector_store %arg11[%c15, %c0_63], %78 {strides = array<i32>} : memref<16x32xf32, #tpu.memory_space<vmem>>, vector<1x32xf32>,
    %c0_64 = arith.constant 0 : index
    %c0_65 = arith.constant 0 : index
    %80 = vector.load %arg11[%c0_64, %c0_65] : memref<16x32xf32, #tpu.memory_space<vmem>>, vector<16x32xf32>
    %c0_66 = arith.constant 0 : index
    %c0_67 = arith.constant 0 : index
    %81 = vector.load %arg3[%c0_66, %c0_67] : memref<16x32xf32, #tpu.memory_space<vmem>>, vector<16x32xf32>
    %82 = arith.addf %80, %81 : vector<16x32xf32>
    %c0_68 = arith.constant 0 : index
    %c0_69 = arith.constant 0 : index
    %83 = vector.load %arg9[%c0_68, %c0_69] : memref<19x128xf32, #tpu.memory_space<vmem>>, vector<1x32xf32>
    %c1_70 = arith.constant 1 : index
    %c0_71 = arith.constant 0 : index
    %84 = vector.load %arg9[%c1_70, %c0_71] : memref<19x128xf32, #tpu.memory_space<vmem>>, vector<1x32xf32>
    %cst = arith.constant dense<0.000000e+00> : vector<16xf32>
    %85 = vector.multi_reduction <add>, %82, %cst [1] : vector<16x32xf32> to vector<16xf32>
    %86 = vector.shape_cast %85 : vector<16xf32> to vector<16x1xf32>
    %cst_72 = arith.constant 3.200000e+01 : f32
    %87 = vector.broadcast %cst_72 : f32 to vector<16x1xf32>
    %88 = arith.divf %86, %87 : vector<16x1xf32>
    %89 = vector.broadcast %88 : vector<16x1xf32> to vector<16x32xf32>
    %90 = arith.subf %82, %89 : vector<16x32xf32>
    %91 = arith.mulf %90, %90 : vector<16x32xf32>
    %cst_73 = arith.constant dense<0.000000e+00> : vector<16xf32>
    %92 = vector.multi_reduction <add>, %91, %cst_73 [1] : vector<16x32xf32> to vector<16xf32>
    %93 = vector.shape_cast %92 : vector<16xf32> to vector<16x1xf32>
    %cst_74 = arith.constant 3.200000e+01 : f32
    %94 = vector.broadcast %cst_74 : f32 to vector<16x1xf32>
    %95 = arith.divf %93, %94 : vector<16x1xf32>
    %cst_75 = arith.constant 9.99999996E-13 : f32
    %96 = vector.broadcast %cst_75 : f32 to vector<16x1xf32>
    %97 = arith.addf %95, %96 : vector<16x1xf32>
    %98 = math.rsqrt %97 : vector<16x1xf32>
    %99 = vector.broadcast %98 : vector<16x1xf32> to vector<16x32xf32>
    %100 = arith.mulf %90, %99 : vector<16x32xf32>
    %101 = vector.broadcast %83 : vector<1x32xf32> to vector<16x32xf32>
    %102 = arith.mulf %100, %101 : vector<16x32xf32>
    %103 = vector.broadcast %84 : vector<1x32xf32> to vector<16x32xf32>
    %104 = arith.addf %102, %103 : vector<16x32xf32>
    %105 = tpu.iota {dimensions = array<i32: 0>} : vector<16x16xi32>
    %106 = tpu.iota {dimensions = array<i32: 1>} : vector<16x16xi32>
    %c8_i32 = arith.constant 8 : i32
    %107 = vector.broadcast %c8_i32 : i32 to vector<16x16xi32>
    %108 = arith.cmpi slt, %105, %107 : vector<16x16xi32>
    %c8_i32_76 = arith.constant 8 : i32
    %109 = vector.broadcast %c8_i32_76 : i32 to vector<16x16xi32>
    %110 = arith.cmpi slt, %106, %109 : vector<16x16xi32>
    %111 = arith.xori %108, %110 : vector<16x16xi1>
    %cst_77 = arith.constant dense<true> : vector<16x16xi1>
    %112 = arith.xori %111, %cst_77 : vector<16x16xi1>
    %cst_78 = arith.constant 0.000000e+00 : f32
    %cst_79 = arith.constant -1.000000e+30 : f32
    %113 = vector.broadcast %cst_78 : f32 to vector<16x16xf32>
    %114 = vector.broadcast %cst_79 : f32 to vector<16x16xf32>
    %115 = arith.select %112, %113, %114 : vector<16x16xi1>, vector<16x16xf32>
    %c0_80 = arith.constant 0 : index
    %c0_81 = arith.constant 0 : index
    %c0_82 = arith.constant 0 : index
    %116 = vector.load %arg4[%c0_80, %c0_81, %c0_82] : memref<2x32x96xf32, #tpu.memory_space<vmem>>, vector<1x32x96xf32>
    %117 = vector.shape_cast %116 : vector<1x32x96xf32> to vector<32x96xf32>
    %c0_83 = arith.constant 0 : index
    %c0_84 = arith.constant 0 : index
    %c0_85 = arith.constant 0 : index
    %118 = vector.load %arg5[%c0_83, %c0_84, %c0_85] : memref<2x32x32xf32, #tpu.memory_space<vmem>>, vector<1x32x32xf32>
    %119 = vector.shape_cast %118 : vector<1x32x32xf32> to vector<32x32xf32>
    %cst_86 = arith.constant dense<0.000000e+00> : vector<16x96xf32>
    %120 = tpu.matmul %104, %117, %cst_86 {dimension_numbers = #tpu.dot_dimension_numbers<[1], [0], [0], [1], [0, 0, 1, 1], [], []>} : vector<16x32xf32>, vector<32x96xf32>, vector<16x96xf32> -> vector<16x96xf32>
    %c3_87 = arith.constant 3 : index
    %c0_88 = arith.constant 0 : index
    %121 = vector.load %arg9[%c3_87, %c0_88] : memref<19x128xf32, #tpu.memory_space<vmem>>, vector<1x96xf32>
    %122 = vector.broadcast %121 : vector<1x96xf32> to vector<16x96xf32>
    %123 = arith.addf %120, %122 : vector<16x96xf32>
    %124 = vector.extract_strided_slice %123 {offsets = [0, 0], sizes = [16, 16], strides = [1, 1]} : vector<16x96xf32> to vector<16x16xf32>
    %125 = vector.extract_strided_slice %123 {offsets = [0, 32], sizes = [16, 16], strides = [1, 1]} : vector<16x96xf32> to vector<16x16xf32>
    %126 = vector.extract_strided_slice %123 {offsets = [0, 64], sizes = [16, 16], strides = [1, 1]} : vector<16x96xf32> to vector<16x16xf32>
    %cst_89 = arith.constant dense<0.000000e+00> : vector<16x16xf32>
    %127 = tpu.matmul %124, %125, %cst_89 {dimension_numbers = #tpu.dot_dimension_numbers<[1], [1], [0], [0], [0, 0, 1, 0], [], []>} : vector<16x16xf32>, vector<16x16xf32>, vector<16x16xf32> -> vector<16x16xf32>
    %cst_90 = arith.constant 2.500000e-01 : f32
    %128 = vector.broadcast %cst_90 : f32 to vector<16x16xf32>
    %129 = arith.mulf %127, %128 : vector<16x16xf32>
    %130 = arith.addf %129, %115 : vector<16x16xf32>
    %cst_91 = arith.constant dense<0xFF800000> : vector<16xf32>
    %131 = vector.multi_reduction <maximumf>, %130, %cst_91 [1] : vector<16x16xf32> to vector<16xf32>
    %132 = vector.shape_cast %131 : vector<16xf32> to vector<16x1xf32>
    %133 = vector.broadcast %132 : vector<16x1xf32> to vector<16x16xf32>
    %134 = arith.subf %130, %133 : vector<16x16xf32>
    %135 = math.exp %134 : vector<16x16xf32>
    %cst_92 = arith.constant dense<0.000000e+00> : vector<16xf32>
    %136 = vector.multi_reduction <add>, %135, %cst_92 [1] : vector<16x16xf32> to vector<16xf32>
    %137 = vector.shape_cast %136 : vector<16xf32> to vector<16x1xf32>
    %138 = tpu.reciprocal %137 {approx = true} : vector<16x1xf32> -> vector<16x1xf32>
    %139 = vector.broadcast %138 : vector<16x1xf32> to vector<16x16xf32>
    %140 = arith.mulf %135, %139 : vector<16x16xf32>
    %cst_93 = arith.constant dense<0.000000e+00> : vector<16x16xf32>
    %141 = tpu.matmul %140, %126, %cst_93 {dimension_numbers = #tpu.dot_dimension_numbers<[1], [0], [0], [1], [0, 0, 1, 1], [], []>} : vector<16x16xf32>, vector<16x16xf32>, vector<16x16xf32> -> vector<16x16xf32>
    %142 = vector.extract_strided_slice %119 {offsets = [0, 0], sizes = [16, 32], strides = [1, 1]} : vector<32x32xf32> to vector<16x32xf32>
    %cst_94 = arith.constant dense<0.000000e+00> : vector<16x32xf32>
    %143 = tpu.matmul %141, %142, %cst_94 {dimension_numbers = #tpu.dot_dimension_numbers<[1], [0], [0], [1], [0, 0, 1, 1], [], []>} : vector<16x16xf32>, vector<16x32xf32>, vector<16x32xf32> -> vector<16x32xf32>
    %144 = vector.extract_strided_slice %123 {offsets = [0, 16], sizes = [16, 16], strides = [1, 1]} : vector<16x96xf32> to vector<16x16xf32>
    %145 = vector.extract_strided_slice %123 {offsets = [0, 48], sizes = [16, 16], strides = [1, 1]} : vector<16x96xf32> to vector<16x16xf32>
    %146 = vector.extract_strided_slice %123 {offsets = [0, 80], sizes = [16, 16], strides = [1, 1]} : vector<16x96xf32> to vector<16x16xf32>
    %cst_95 = arith.constant dense<0.000000e+00> : vector<16x16xf32>
    %147 = tpu.matmul %144, %145, %cst_95 {dimension_numbers = #tpu.dot_dimension_numbers<[1], [1], [0], [0], [0, 0, 1, 0], [], []>} : vector<16x16xf32>, vector<16x16xf32>, vector<16x16xf32> -> vector<16x16xf32>
    %cst_96 = arith.constant 2.500000e-01 : f32
    %148 = vector.broadcast %cst_96 : f32 to vector<16x16xf32>
    %149 = arith.mulf %147, %148 : vector<16x16xf32>
    %150 = arith.addf %149, %115 : vector<16x16xf32>
    %cst_97 = arith.constant dense<0xFF800000> : vector<16xf32>
    %151 = vector.multi_reduction <maximumf>, %150, %cst_97 [1] : vector<16x16xf32> to vector<16xf32>
    %152 = vector.shape_cast %151 : vector<16xf32> to vector<16x1xf32>
    %153 = vector.broadcast %152 : vector<16x1xf32> to vector<16x16xf32>
    %154 = arith.subf %150, %153 : vector<16x16xf32>
    %155 = math.exp %154 : vector<16x16xf32>
    %cst_98 = arith.constant dense<0.000000e+00> : vector<16xf32>
    %156 = vector.multi_reduction <add>, %155, %cst_98 [1] : vector<16x16xf32> to vector<16xf32>
    %157 = vector.shape_cast %156 : vector<16xf32> to vector<16x1xf32>
    %158 = tpu.reciprocal %157 {approx = true} : vector<16x1xf32> -> vector<16x1xf32>
    %159 = vector.broadcast %158 : vector<16x1xf32> to vector<16x16xf32>
    %160 = arith.mulf %155, %159 : vector<16x16xf32>
    %cst_99 = arith.constant dense<0.000000e+00> : vector<16x16xf32>
    %161 = tpu.matmul %160, %146, %cst_99 {dimension_numbers = #tpu.dot_dimension_numbers<[1], [0], [0], [1], [0, 0, 1, 1], [], []>} : vector<16x16xf32>, vector<16x16xf32>, vector<16x16xf32> -> vector<16x16xf32>
    %162 = vector.extract_strided_slice %119 {offsets = [16, 0], sizes = [16, 32], strides = [1, 1]} : vector<32x32xf32> to vector<16x32xf32>
    %cst_100 = arith.constant dense<0.000000e+00> : vector<16x32xf32>
    %163 = tpu.matmul %161, %162, %cst_100 {dimension_numbers = #tpu.dot_dimension_numbers<[1], [0], [0], [1], [0, 0, 1, 1], [], []>} : vector<16x16xf32>, vector<16x32xf32>, vector<16x32xf32> -> vector<16x32xf32>
    %164 = arith.addf %143, %163 : vector<16x32xf32>
    %c4_101 = arith.constant 4 : index
    %c0_102 = arith.constant 0 : index
    %165 = vector.load %arg9[%c4_101, %c0_102] : memref<19x128xf32, #tpu.memory_space<vmem>>, vector<1x32xf32>
    %166 = vector.broadcast %165 : vector<1x32xf32> to vector<16x32xf32>
    %167 = arith.addf %164, %166 : vector<16x32xf32>
    %168 = arith.addf %104, %167 : vector<16x32xf32>
    %c7_103 = arith.constant 7 : index
    %c0_104 = arith.constant 0 : index
    %169 = vector.load %arg9[%c7_103, %c0_104] : memref<19x128xf32, #tpu.memory_space<vmem>>, vector<1x32xf32>
    %c8_105 = arith.constant 8 : index
    %c0_106 = arith.constant 0 : index
    %170 = vector.load %arg9[%c8_105, %c0_106] : memref<19x128xf32, #tpu.memory_space<vmem>>, vector<1x32xf32>
    %cst_107 = arith.constant dense<0.000000e+00> : vector<16xf32>
    %171 = vector.multi_reduction <add>, %168, %cst_107 [1] : vector<16x32xf32> to vector<16xf32>
    %172 = vector.shape_cast %171 : vector<16xf32> to vector<16x1xf32>
    %cst_108 = arith.constant 3.200000e+01 : f32
    %173 = vector.broadcast %cst_108 : f32 to vector<16x1xf32>
    %174 = arith.divf %172, %173 : vector<16x1xf32>
    %175 = vector.broadcast %174 : vector<16x1xf32> to vector<16x32xf32>
    %176 = arith.subf %168, %175 : vector<16x32xf32>
    %177 = arith.mulf %176, %176 : vector<16x32xf32>
    %cst_109 = arith.constant dense<0.000000e+00> : vector<16xf32>
    %178 = vector.multi_reduction <add>, %177, %cst_109 [1] : vector<16x32xf32> to vector<16xf32>
    %179 = vector.shape_cast %178 : vector<16xf32> to vector<16x1xf32>
    %cst_110 = arith.constant 3.200000e+01 : f32
    %180 = vector.broadcast %cst_110 : f32 to vector<16x1xf32>
    %181 = arith.divf %179, %180 : vector<16x1xf32>
    %cst_111 = arith.constant 9.99999996E-13 : f32
    %182 = vector.broadcast %cst_111 : f32 to vector<16x1xf32>
    %183 = arith.addf %181, %182 : vector<16x1xf32>
    %184 = math.rsqrt %183 : vector<16x1xf32>
    %185 = vector.broadcast %184 : vector<16x1xf32> to vector<16x32xf32>
    %186 = arith.mulf %176, %185 : vector<16x32xf32>
    %187 = vector.broadcast %169 : vector<1x32xf32> to vector<16x32xf32>
    %188 = arith.mulf %186, %187 : vector<16x32xf32>
    %189 = vector.broadcast %170 : vector<1x32xf32> to vector<16x32xf32>
    %190 = arith.addf %188, %189 : vector<16x32xf32>
    %c0_112 = arith.constant 0 : index
    %c0_113 = arith.constant 0 : index
    %c0_114 = arith.constant 0 : index
    %191 = vector.load %arg6[%c0_112, %c0_113, %c0_114] : memref<2x32x64xf32, #tpu.memory_space<vmem>>, vector<1x32x64xf32>
    %192 = vector.shape_cast %191 : vector<1x32x64xf32> to vector<32x64xf32>
    %cst_115 = arith.constant dense<0.000000e+00> : vector<16x64xf32>
    %193 = tpu.matmul %190, %192, %cst_115 {dimension_numbers = #tpu.dot_dimension_numbers<[1], [0], [0], [1], [0, 0, 1, 1], [], []>} : vector<16x32xf32>, vector<32x64xf32>, vector<16x64xf32> -> vector<16x64xf32>
    %c5_116 = arith.constant 5 : index
    %c0_117 = arith.constant 0 : index
    %194 = vector.load %arg9[%c5_116, %c0_117] : memref<19x128xf32, #tpu.memory_space<vmem>>, vector<1x64xf32>
    %195 = vector.broadcast %194 : vector<1x64xf32> to vector<16x64xf32>
    %196 = arith.addf %193, %195 : vector<16x64xf32>
    %197 = arith.mulf %196, %196 : vector<16x64xf32>
    %198 = arith.mulf %196, %197 : vector<16x64xf32>
    %cst_118 = arith.constant 4.471500e-02 : f32
    %199 = vector.broadcast %cst_118 : f32 to vector<16x64xf32>
    %200 = arith.mulf %199, %198 : vector<16x64xf32>
    %201 = arith.addf %196, %200 : vector<16x64xf32>
    %cst_119 = arith.constant 0.797884583 : f32
    %202 = vector.broadcast %cst_119 : f32 to vector<16x64xf32>
    %203 = arith.mulf %202, %201 : vector<16x64xf32>
    %204 = math.tanh %203 : vector<16x64xf32>
    %cst_120 = arith.constant 1.000000e+00 : f32
    %205 = vector.broadcast %cst_120 : f32 to vector<16x64xf32>
    %206 = arith.addf %205, %204 : vector<16x64xf32>
    %cst_121 = arith.constant 5.000000e-01 : f32
    %207 = vector.broadcast %cst_121 : f32 to vector<16x64xf32>
    %208 = arith.mulf %207, %206 : vector<16x64xf32>
    %209 = arith.mulf %196, %208 : vector<16x64xf32>
    %c0_122 = arith.constant 0 : index
    %c0_123 = arith.constant 0 : index
    %c0_124 = arith.constant 0 : index
    %210 = vector.load %arg7[%c0_122, %c0_123, %c0_124] : memref<2x64x32xf32, #tpu.memory_space<vmem>>, vector<1x64x32xf32>
    %211 = vector.shape_cast %210 : vector<1x64x32xf32> to vector<64x32xf32>
    %cst_125 = arith.constant dense<0.000000e+00> : vector<16x32xf32>
    %212 = tpu.matmul %209, %211, %cst_125 {dimension_numbers = #tpu.dot_dimension_numbers<[1], [0], [0], [1], [0, 0, 1, 1], [], []>} : vector<16x64xf32>, vector<64x32xf32>, vector<16x32xf32> -> vector<16x32xf32>
    %c6_126 = arith.constant 6 : index
    %c0_127 = arith.constant 0 : index
    %213 = vector.load %arg9[%c6_126, %c0_127] : memref<19x128xf32, #tpu.memory_space<vmem>>, vector<1x32xf32>
    %214 = vector.broadcast %213 : vector<1x32xf32> to vector<16x32xf32>
    %215 = arith.addf %212, %214 : vector<16x32xf32>
    %216 = arith.addf %190, %215 : vector<16x32xf32>
    %c9_128 = arith.constant 9 : index
    %c0_129 = arith.constant 0 : index
    %217 = vector.load %arg9[%c9_128, %c0_129] : memref<19x128xf32, #tpu.memory_space<vmem>>, vector<1x32xf32>
    %c10_130 = arith.constant 10 : index
    %c0_131 = arith.constant 0 : index
    %218 = vector.load %arg9[%c10_130, %c0_131] : memref<19x128xf32, #tpu.memory_space<vmem>>, vector<1x32xf32>
    %cst_132 = arith.constant dense<0.000000e+00> : vector<16xf32>
    %219 = vector.multi_reduction <add>, %216, %cst_132 [1] : vector<16x32xf32> to vector<16xf32>
    %220 = vector.shape_cast %219 : vector<16xf32> to vector<16x1xf32>
    %cst_133 = arith.constant 3.200000e+01 : f32
    %221 = vector.broadcast %cst_133 : f32 to vector<16x1xf32>
    %222 = arith.divf %220, %221 : vector<16x1xf32>
    %223 = vector.broadcast %222 : vector<16x1xf32> to vector<16x32xf32>
    %224 = arith.subf %216, %223 : vector<16x32xf32>
    %225 = arith.mulf %224, %224 : vector<16x32xf32>
    %cst_134 = arith.constant dense<0.000000e+00> : vector<16xf32>
    %226 = vector.multi_reduction <add>, %225, %cst_134 [1] : vector<16x32xf32> to vector<16xf32>
    %227 = vector.shape_cast %226 : vector<16xf32> to vector<16x1xf32>
    %cst_135 = arith.constant 3.200000e+01 : f32
    %228 = vector.broadcast %cst_135 : f32 to vector<16x1xf32>
    %229 = arith.divf %227, %228 : vector<16x1xf32>
    %cst_136 = arith.constant 9.99999996E-13 : f32
    %230 = vector.broadcast %cst_136 : f32 to vector<16x1xf32>
    %231 = arith.addf %229, %230 : vector<16x1xf32>
    %232 = math.rsqrt %231 : vector<16x1xf32>
    %233 = vector.broadcast %232 : vector<16x1xf32> to vector<16x32xf32>
    %234 = arith.mulf %224, %233 : vector<16x32xf32>
    %235 = vector.broadcast %217 : vector<1x32xf32> to vector<16x32xf32>
    %236 = arith.mulf %234, %235 : vector<16x32xf32>
    %237 = vector.broadcast %218 : vector<1x32xf32> to vector<16x32xf32>
    %238 = arith.addf %236, %237 : vector<16x32xf32>
    %c1_137 = arith.constant 1 : index
    %c0_138 = arith.constant 0 : index
    %c0_139 = arith.constant 0 : index
    %239 = vector.load %arg4[%c1_137, %c0_138, %c0_139] : memref<2x32x96xf32, #tpu.memory_space<vmem>>, vector<1x32x96xf32>
    %240 = vector.shape_cast %239 : vector<1x32x96xf32> to vector<32x96xf32>
    %c1_140 = arith.constant 1 : index
    %c0_141 = arith.constant 0 : index
    %c0_142 = arith.constant 0 : index
    %241 = vector.load %arg5[%c1_140, %c0_141, %c0_142] : memref<2x32x32xf32, #tpu.memory_space<vmem>>, vector<1x32x32xf32>
    %242 = vector.shape_cast %241 : vector<1x32x32xf32> to vector<32x32xf32>
    %cst_143 = arith.constant dense<0.000000e+00> : vector<16x96xf32>
    %243 = tpu.matmul %238, %240, %cst_143 {dimension_numbers = #tpu.dot_dimension_numbers<[1], [0], [0], [1], [0, 0, 1, 1], [], []>} : vector<16x32xf32>, vector<32x96xf32>, vector<16x96xf32> -> vector<16x96xf32>
    %c11_144 = arith.constant 11 : index
    %c0_145 = arith.constant 0 : index
    %244 = vector.load %arg9[%c11_144, %c0_145] : memref<19x128xf32, #tpu.memory_space<vmem>>, vector<1x96xf32>
    %245 = vector.broadcast %244 : vector<1x96xf32> to vector<16x96xf32>
    %246 = arith.addf %243, %245 : vector<16x96xf32>
    %247 = vector.extract_strided_slice %246 {offsets = [0, 0], sizes = [16, 16], strides = [1, 1]} : vector<16x96xf32> to vector<16x16xf32>
    %248 = vector.extract_strided_slice %246 {offsets = [0, 32], sizes = [16, 16], strides = [1, 1]} : vector<16x96xf32> to vector<16x16xf32>
    %249 = vector.extract_strided_slice %246 {offsets = [0, 64], sizes = [16, 16], strides = [1, 1]} : vector<16x96xf32> to vector<16x16xf32>
    %cst_146 = arith.constant dense<0.000000e+00> : vector<16x16xf32>
    %250 = tpu.matmul %247, %248, %cst_146 {dimension_numbers = #tpu.dot_dimension_numbers<[1], [1], [0], [0], [0, 0, 1, 0], [], []>} : vector<16x16xf32>, vector<16x16xf32>, vector<16x16xf32> -> vector<16x16xf32>
    %cst_147 = arith.constant 2.500000e-01 : f32
    %251 = vector.broadcast %cst_147 : f32 to vector<16x16xf32>
    %252 = arith.mulf %250, %251 : vector<16x16xf32>
    %253 = arith.addf %252, %115 : vector<16x16xf32>
    %cst_148 = arith.constant dense<0xFF800000> : vector<16xf32>
    %254 = vector.multi_reduction <maximumf>, %253, %cst_148 [1] : vector<16x16xf32> to vector<16xf32>
    %255 = vector.shape_cast %254 : vector<16xf32> to vector<16x1xf32>
    %256 = vector.broadcast %255 : vector<16x1xf32> to vector<16x16xf32>
    %257 = arith.subf %253, %256 : vector<16x16xf32>
    %258 = math.exp %257 : vector<16x16xf32>
    %cst_149 = arith.constant dense<0.000000e+00> : vector<16xf32>
    %259 = vector.multi_reduction <add>, %258, %cst_149 [1] : vector<16x16xf32> to vector<16xf32>
    %260 = vector.shape_cast %259 : vector<16xf32> to vector<16x1xf32>
    %261 = tpu.reciprocal %260 {approx = true} : vector<16x1xf32> -> vector<16x1xf32>
    %262 = vector.broadcast %261 : vector<16x1xf32> to vector<16x16xf32>
    %263 = arith.mulf %258, %262 : vector<16x16xf32>
    %cst_150 = arith.constant dense<0.000000e+00> : vector<16x16xf32>
    %264 = tpu.matmul %263, %249, %cst_150 {dimension_numbers = #tpu.dot_dimension_numbers<[1], [0], [0], [1], [0, 0, 1, 1], [], []>} : vector<16x16xf32>, vector<16x16xf32>, vector<16x16xf32> -> vector<16x16xf32>
    %265 = vector.extract_strided_slice %242 {offsets = [0, 0], sizes = [16, 32], strides = [1, 1]} : vector<32x32xf32> to vector<16x32xf32>
    %cst_151 = arith.constant dense<0.000000e+00> : vector<16x32xf32>
    %266 = tpu.matmul %264, %265, %cst_151 {dimension_numbers = #tpu.dot_dimension_numbers<[1], [0], [0], [1], [0, 0, 1, 1], [], []>} : vector<16x16xf32>, vector<16x32xf32>, vector<16x32xf32> -> vector<16x32xf32>
    %267 = vector.extract_strided_slice %246 {offsets = [0, 16], sizes = [16, 16], strides = [1, 1]} : vector<16x96xf32> to vector<16x16xf32>
    %268 = vector.extract_strided_slice %246 {offsets = [0, 48], sizes = [16, 16], strides = [1, 1]} : vector<16x96xf32> to vector<16x16xf32>
    %269 = vector.extract_strided_slice %246 {offsets = [0, 80], sizes = [16, 16], strides = [1, 1]} : vector<16x96xf32> to vector<16x16xf32>
    %cst_152 = arith.constant dense<0.000000e+00> : vector<16x16xf32>
    %270 = tpu.matmul %267, %268, %cst_152 {dimension_numbers = #tpu.dot_dimension_numbers<[1], [1], [0], [0], [0, 0, 1, 0], [], []>} : vector<16x16xf32>, vector<16x16xf32>, vector<16x16xf32> -> vector<16x16xf32>
    %cst_153 = arith.constant 2.500000e-01 : f32
    %271 = vector.broadcast %cst_153 : f32 to vector<16x16xf32>
    %272 = arith.mulf %270, %271 : vector<16x16xf32>
    %273 = arith.addf %272, %115 : vector<16x16xf32>
    %cst_154 = arith.constant dense<0xFF800000> : vector<16xf32>
    %274 = vector.multi_reduction <maximumf>, %273, %cst_154 [1] : vector<16x16xf32> to vector<16xf32>
    %275 = vector.shape_cast %274 : vector<16xf32> to vector<16x1xf32>
    %276 = vector.broadcast %275 : vector<16x1xf32> to vector<16x16xf32>
    %277 = arith.subf %273, %276 : vector<16x16xf32>
    %278 = math.exp %277 : vector<16x16xf32>
    %cst_155 = arith.constant dense<0.000000e+00> : vector<16xf32>
    %279 = vector.multi_reduction <add>, %278, %cst_155 [1] : vector<16x16xf32> to vector<16xf32>
    %280 = vector.shape_cast %279 : vector<16xf32> to vector<16x1xf32>
    %281 = tpu.reciprocal %280 {approx = true} : vector<16x1xf32> -> vector<16x1xf32>
    %282 = vector.broadcast %281 : vector<16x1xf32> to vector<16x16xf32>
    %283 = arith.mulf %278, %282 : vector<16x16xf32>
    %cst_156 = arith.constant dense<0.000000e+00> : vector<16x16xf32>
    %284 = tpu.matmul %283, %269, %cst_156 {dimension_numbers = #tpu.dot_dimension_numbers<[1], [0], [0], [1], [0, 0, 1, 1], [], []>} : vector<16x16xf32>, vector<16x16xf32>, vector<16x16xf32> -> vector<16x16xf32>
    %285 = vector.extract_strided_slice %242 {offsets = [16, 0], sizes = [16, 32], strides = [1, 1]} : vector<32x32xf32> to vector<16x32xf32>
    %cst_157 = arith.constant dense<0.000000e+00> : vector<16x32xf32>
    %286 = tpu.matmul %284, %285, %cst_157 {dimension_numbers = #tpu.dot_dimension_numbers<[1], [0], [0], [1], [0, 0, 1, 1], [], []>} : vector<16x16xf32>, vector<16x32xf32>, vector<16x32xf32> -> vector<16x32xf32>
    %287 = arith.addf %266, %286 : vector<16x32xf32>
    %c12_158 = arith.constant 12 : index
    %c0_159 = arith.constant 0 : index
    %288 = vector.load %arg9[%c12_158, %c0_159] : memref<19x128xf32, #tpu.memory_space<vmem>>, vector<1x32xf32>
    %289 = vector.broadcast %288 : vector<1x32xf32> to vector<16x32xf32>
    %290 = arith.addf %287, %289 : vector<16x32xf32>
    %291 = arith.addf %238, %290 : vector<16x32xf32>
    %c15_160 = arith.constant 15 : index
    %c0_161 = arith.constant 0 : index
    %292 = vector.load %arg9[%c15_160, %c0_161] : memref<19x128xf32, #tpu.memory_space<vmem>>, vector<1x32xf32>
    %c16 = arith.constant 16 : index
    %c0_162 = arith.constant 0 : index
    %293 = vector.load %arg9[%c16, %c0_162] : memref<19x128xf32, #tpu.memory_space<vmem>>, vector<1x32xf32>
    %cst_163 = arith.constant dense<0.000000e+00> : vector<16xf32>
    %294 = vector.multi_reduction <add>, %291, %cst_163 [1] : vector<16x32xf32> to vector<16xf32>
    %295 = vector.shape_cast %294 : vector<16xf32> to vector<16x1xf32>
    %cst_164 = arith.constant 3.200000e+01 : f32
    %296 = vector.broadcast %cst_164 : f32 to vector<16x1xf32>
    %297 = arith.divf %295, %296 : vector<16x1xf32>
    %298 = vector.broadcast %297 : vector<16x1xf32> to vector<16x32xf32>
    %299 = arith.subf %291, %298 : vector<16x32xf32>
    %300 = arith.mulf %299, %299 : vector<16x32xf32>
    %cst_165 = arith.constant dense<0.000000e+00> : vector<16xf32>
    %301 = vector.multi_reduction <add>, %300, %cst_165 [1] : vector<16x32xf32> to vector<16xf32>
    %302 = vector.shape_cast %301 : vector<16xf32> to vector<16x1xf32>
    %cst_166 = arith.constant 3.200000e+01 : f32
    %303 = vector.broadcast %cst_166 : f32 to vector<16x1xf32>
    %304 = arith.divf %302, %303 : vector<16x1xf32>
    %cst_167 = arith.constant 9.99999996E-13 : f32
    %305 = vector.broadcast %cst_167 : f32 to vector<16x1xf32>
    %306 = arith.addf %304, %305 : vector<16x1xf32>
    %307 = math.rsqrt %306 : vector<16x1xf32>
    %308 = vector.broadcast %307 : vector<16x1xf32> to vector<16x32xf32>
    %309 = arith.mulf %299, %308 : vector<16x32xf32>
    %310 = vector.broadcast %292 : vector<1x32xf32> to vector<16x32xf32>
    %311 = arith.mulf %309, %310 : vector<16x32xf32>
    %312 = vector.broadcast %293 : vector<1x32xf32> to vector<16x32xf32>
    %313 = arith.addf %311, %312 : vector<16x32xf32>
    %c1_168 = arith.constant 1 : index
    %c0_169 = arith.constant 0 : index
    %c0_170 = arith.constant 0 : index
    %314 = vector.load %arg6[%c1_168, %c0_169, %c0_170] : memref<2x32x64xf32, #tpu.memory_space<vmem>>, vector<1x32x64xf32>
    %315 = vector.shape_cast %314 : vector<1x32x64xf32> to vector<32x64xf32>
    %cst_171 = arith.constant dense<0.000000e+00> : vector<16x64xf32>
    %316 = tpu.matmul %313, %315, %cst_171 {dimension_numbers = #tpu.dot_dimension_numbers<[1], [0], [0], [1], [0, 0, 1, 1], [], []>} : vector<16x32xf32>, vector<32x64xf32>, vector<16x64xf32> -> vector<16x64xf32>
    %c13_172 = arith.constant 13 : index
    %c0_173 = arith.constant 0 : index
    %317 = vector.load %arg9[%c13_172, %c0_173] : memref<19x128xf32, #tpu.memory_space<vmem>>, vector<1x64xf32>
    %318 = vector.broadcast %317 : vector<1x64xf32> to vector<16x64xf32>
    %319 = arith.addf %316, %318 : vector<16x64xf32>
    %320 = arith.mulf %319, %319 : vector<16x64xf32>
    %321 = arith.mulf %319, %320 : vector<16x64xf32>
    %cst_174 = arith.constant 4.471500e-02 : f32
    %322 = vector.broadcast %cst_174 : f32 to vector<16x64xf32>
    %323 = arith.mulf %322, %321 : vector<16x64xf32>
    %324 = arith.addf %319, %323 : vector<16x64xf32>
    %cst_175 = arith.constant 0.797884583 : f32
    %325 = vector.broadcast %cst_175 : f32 to vector<16x64xf32>
    %326 = arith.mulf %325, %324 : vector<16x64xf32>
    %327 = math.tanh %326 : vector<16x64xf32>
    %cst_176 = arith.constant 1.000000e+00 : f32
    %328 = vector.broadcast %cst_176 : f32 to vector<16x64xf32>
    %329 = arith.addf %328, %327 : vector<16x64xf32>
    %cst_177 = arith.constant 5.000000e-01 : f32
    %330 = vector.broadcast %cst_177 : f32 to vector<16x64xf32>
    %331 = arith.mulf %330, %329 : vector<16x64xf32>
    %332 = arith.mulf %319, %331 : vector<16x64xf32>
    %c1_178 = arith.constant 1 : index
    %c0_179 = arith.constant 0 : index
    %c0_180 = arith.constant 0 : index
    %333 = vector.load %arg7[%c1_178, %c0_179, %c0_180] : memref<2x64x32xf32, #tpu.memory_space<vmem>>, vector<1x64x32xf32>
    %334 = vector.shape_cast %333 : vector<1x64x32xf32> to vector<64x32xf32>
    %cst_181 = arith.constant dense<0.000000e+00> : vector<16x32xf32>
    %335 = tpu.matmul %332, %334, %cst_181 {dimension_numbers = #tpu.dot_dimension_numbers<[1], [0], [0], [1], [0, 0, 1, 1], [], []>} : vector<16x64xf32>, vector<64x32xf32>, vector<16x32xf32> -> vector<16x32xf32>
    %c14_182 = arith.constant 14 : index
    %c0_183 = arith.constant 0 : index
    %336 = vector.load %arg9[%c14_182, %c0_183] : memref<19x128xf32, #tpu.memory_space<vmem>>, vector<1x32xf32>
    %337 = vector.broadcast %336 : vector<1x32xf32> to vector<16x32xf32>
    %338 = arith.addf %335, %337 : vector<16x32xf32>
    %339 = arith.addf %313, %338 : vector<16x32xf32>
    %c17 = arith.constant 17 : index
    %c0_184 = arith.constant 0 : index
    %340 = vector.load %arg9[%c17, %c0_184] : memref<19x128xf32, #tpu.memory_space<vmem>>, vector<1x32xf32>
    %c18 = arith.constant 18 : index
    %c0_185 = arith.constant 0 : index
    %341 = vector.load %arg9[%c18, %c0_185] : memref<19x128xf32, #tpu.memory_space<vmem>>, vector<1x32xf32>
    %cst_186 = arith.constant dense<0.000000e+00> : vector<16xf32>
    %342 = vector.multi_reduction <add>, %339, %cst_186 [1] : vector<16x32xf32> to vector<16xf32>
    %343 = vector.shape_cast %342 : vector<16xf32> to vector<16x1xf32>
    %cst_187 = arith.constant 3.200000e+01 : f32
    %344 = vector.broadcast %cst_187 : f32 to vector<16x1xf32>
    %345 = arith.divf %343, %344 : vector<16x1xf32>
    %346 = vector.broadcast %345 : vector<16x1xf32> to vector<16x32xf32>
    %347 = arith.subf %339, %346 : vector<16x32xf32>
    %348 = arith.mulf %347, %347 : vector<16x32xf32>
    %cst_188 = arith.constant dense<0.000000e+00> : vector<16xf32>
    %349 = vector.multi_reduction <add>, %348, %cst_188 [1] : vector<16x32xf32> to vector<16xf32>
    %350 = vector.shape_cast %349 : vector<16xf32> to vector<16x1xf32>
    %cst_189 = arith.constant 3.200000e+01 : f32
    %351 = vector.broadcast %cst_189 : f32 to vector<16x1xf32>
    %352 = arith.divf %350, %351 : vector<16x1xf32>
    %cst_190 = arith.constant 9.99999996E-13 : f32
    %353 = vector.broadcast %cst_190 : f32 to vector<16x1xf32>
    %354 = arith.addf %352, %353 : vector<16x1xf32>
    %355 = math.rsqrt %354 : vector<16x1xf32>
    %356 = vector.broadcast %355 : vector<16x1xf32> to vector<16x32xf32>
    %357 = arith.mulf %347, %356 : vector<16x32xf32>
    %358 = vector.broadcast %340 : vector<1x32xf32> to vector<16x32xf32>
    %359 = arith.mulf %357, %358 : vector<16x32xf32>
    %360 = vector.broadcast %341 : vector<1x32xf32> to vector<16x32xf32>
    %361 = arith.addf %359, %360 : vector<16x32xf32>
    %c0_191 = arith.constant 0 : index
    %c0_192 = arith.constant 0 : index
    %362 = vector.load %arg8[%c0_191, %c0_192] : memref<32x32xf32, #tpu.memory_space<vmem>>, vector<32x32xf32>
    %cst_193 = arith.constant dense<0.000000e+00> : vector<16x32xf32>
    %363 = tpu.matmul %361, %362, %cst_193 {dimension_numbers = #tpu.dot_dimension_numbers<[1], [0], [0], [1], [0, 0, 1, 1], [], []>} : vector<16x32xf32>, vector<32x32xf32>, vector<16x32xf32> -> vector<16x32xf32>
    %c2_194 = arith.constant 2 : index
    %c0_195 = arith.constant 0 : index
    %364 = vector.load %arg9[%c2_194, %c0_195] : memref<19x128xf32, #tpu.memory_space<vmem>>, vector<1x32xf32>
    %365 = vector.broadcast %364 : vector<1x32xf32> to vector<16x32xf32>
    %366 = arith.addf %363, %365 : vector<16x32xf32>
    %367 = math.tanh %366 : vector<16x32xf32>
    %368 = vector.extract_strided_slice %367 {offsets = [0, 0], sizes = [1, 32], strides = [1, 1]} : vector<16x32xf32> to vector<1x32xf32>
    %369 = vector.extract_strided_slice %367 {offsets = [8, 0], sizes = [1, 32], strides = [1, 1]} : vector<16x32xf32> to vector<1x32xf32>
    %370 = arith.mulf %368, %369 : vector<1x32xf32>
    %cst_196 = arith.constant dense<0.000000e+00> : vector<1xf32>
    %371 = vector.multi_reduction <add>, %370, %cst_196 [1] : vector<1x32xf32> to vector<1xf32>
    %372 = vector.shape_cast %371 : vector<1xf32> to vector<1x1xf32>
    %373 = arith.mulf %368, %368 : vector<1x32xf32>
    %cst_197 = arith.constant dense<0.000000e+00> : vector<1xf32>
    %374 = vector.multi_reduction <add>, %373, %cst_197 [1] : vector<1x32xf32> to vector<1xf32>
    %375 = vector.shape_cast %374 : vector<1xf32> to vector<1x1xf32>
    %376 = math.sqrt %375 : vector<1x1xf32>
    %377 = arith.mulf %369, %369 : vector<1x32xf32>
    %cst_198 = arith.constant dense<0.000000e+00> : vector<1xf32>
    %378 = vector.multi_reduction <add>, %377, %cst_198 [1] : vector<1x32xf32> to vector<1xf32>
    %379 = vector.shape_cast %378 : vector<1xf32> to vector<1x1xf32>
    %380 = math.sqrt %379 : vector<1x1xf32>
    %381 = arith.mulf %376, %380 : vector<1x1xf32>
    %cst_199 = arith.constant 9.99999993E-9 : f32
    %382 = vector.broadcast %cst_199 : f32 to vector<1x1xf32>
    %383 = arith.maximumf %381, %382 : vector<1x1xf32>
    %384 = arith.divf %372, %383 : vector<1x1xf32>
    %c0_200 = arith.constant 0 : index
    %c0_201 = arith.constant 0 : index
    %385 = vector.load %arg10[%c0_200, %c0_201] : memref<1x1xf32, #tpu.memory_space<vmem>>, vector<1x1xf32>
    tpu.vector_store %arg10[%c0_200, %c0_201], %384 {strides = array<i32>} : memref<1x1xf32, #tpu.memory_space<vmem>>, vector<1x1xf32>,
    return
  }
}

</mosaic_0001>

<llo_original>
// kernel: text_similarity.1
$region0: #{text_similarity.1}
  #allocation0 [shape = 'u32[]', space=smem, size = 0x4, offset = 0x4, fixed_abs, tag = 'smem constant byte address 0x4 - core index']
  #allocation1 [shape = 'u32[144,128]{1,0:T(1,128)}', space=vmem, size = 0x12000, scoped, tag = 'internal scratch']
  #allocation2 [shape = 'f32[16,32]{1,0:T(8,128)}', space=vmem, size = 0x2000, scoped, tag = 'scratch operand']
  %s0 = inlined_call_operand.vmem [shape: s32[8], index: 0, kind: input, shape index: {}]
  %s1 = inlined_call_operand.vmem [shape: s32[8], index: 1, kind: input, shape index: {}]
  %s2 = inlined_call_operand.vmem [shape: f32[64,1,32], index: 2, kind: input, shape index: {}]
  %s3 = inlined_call_operand.hbm [shape: f32[16,32], index: 3, kind: input, shape index: {}]
  %s4 = inlined_call_operand.vmem [shape: f32[2,32,96], index: 4, kind: input, shape index: {}]
  %s5 = inlined_call_operand.vmem [shape: f32[2,32,32], index: 5, kind: input, shape index: {}]
  %s6 = inlined_call_operand.vmem [shape: f32[2,32,64], index: 6, kind: input, shape index: {}]
  %s7 = inlined_call_operand.vmem [shape: f32[2,64,32], index: 7, kind: input, shape index: {}]
  %s8 = inlined_call_operand.vmem [shape: f32[32,32], index: 8, kind: input, shape index: {}]
  %s9 = inlined_call_operand.vmem [shape: f32[19,128], index: 9, kind: input, shape index: {}]
  %s10 = inlined_call_operand.hbm [shape: f32[1,1], index: 10, kind: output, shape index: {}]
  %s11 = sld [smem:[#allocation0]]
  $region62: #{text_similarity.1} parent=0
    _
  %s13 = ssub.s32 1, %s11
  %s14 = scalar_select 0, %s13, %s11
  $region1: #{text_similarity.1} parent=0
    #allocation3 [shape = 'u8[512]{0}', space=smem, size = 0x200, scoped, tag = 'input window, operand 0, single buffered']
    #allocation4 [shape = 's32[1]{0}', space=sflag, size = 0x4, scoped, tag = 'scoped memory for text_similarity.1']
    #allocation5 [shape = 's32[1]{0}', space=sflag, size = 0x4, scoped, tag = 'scoped memory for text_similarity.1']
    #allocation6 [shape = 's32[1]{0}', space=sflag, size = 0x4, scoped, tag = 'scoped memory for text_similarity.1']
    #allocation7 [shape = 'u8[512]{0}', space=smem, size = 0x200, scoped, tag = 'input window, operand 1, single buffered']
    #allocation8 [shape = 's32[1]{0}', space=sflag, size = 0x4, scoped, tag = 'scoped memory for text_similarity.1']
    #allocation9 [shape = 'u8[8192]{0}', space=vmem, size = 0x2000, scoped, tag = 'input window, operand 3, single buffered']
    #allocation10 [shape = 'u8[512]{0}', space=vmem, size = 0x400, scoped, tag = 'output window, operand 0, single buffered']
    %15 = vsyncpa [#allocation6], 0
    %16 = vsyncpa [#allocation8], 0
    %17 = vsyncpa [#allocation4], 0
    %18 = vsyncpa [#allocation5], 0
    // Predicated region
    $region2: #{text_similarity.1} parent=1 // pred_check
      _
    $region3: #{text_similarity.1} parent=1 // pred_check_branch
      %20 = sbr.rel (0) target = $region5
    $region4: #{text_similarity.1} parent=1 // pred_region
      %s22 = ssub.s32 16, 16
      %23 = vsyncadd [#allocation6], %s22
      %s25 = sshll.u32 %s0, 4
      %s26 = int_to_ptr.vmem [resolvable:$true] %s25
      %28 = dma.vmem_to_smem %s26, 16, [#allocation3], [#allocation6]
    $region5: #{text_similarity.1} parent=1 // pred_fallthru
      _
    // Predicated region
    $region6: #{text_similarity.1} parent=1 // pred_check
      _
    $region7: #{text_similarity.1} parent=1 // pred_check_branch
      %30 = sbr.rel (0) target = $region9
    $region8: #{text_similarity.1} parent=1 // pred_region
      %s32 = ssub.s32 16, 16
      %33 = vsyncadd [#allocation8], %s32
      %s35 = sshll.u32 %s1, 4
      %s36 = int_to_ptr.vmem [resolvable:$true] %s35
      %38 = dma.vmem_to_smem %s36, 16, [#allocation7], [#allocation8]
    $region9: #{text_similarity.1} parent=1 // pred_fallthru
      _
    // Predicated region
    $region10: #{text_similarity.1} parent=1 // pred_check
      _
    $region11: #{text_similarity.1} parent=1 // pred_check_branch
      %40 = sbr.rel (0) target = $region13
    $region12: #{text_similarity.1} parent=1 // pred_region
      _
    $region13: #{text_similarity.1} parent=1 // pred_fallthru
      _
    // Predicated region
    $region14: #{text_similarity.1} parent=1 // pred_check
      _
    $region15: #{text_similarity.1} parent=1 // pred_check_branch
      %42 = sbr.rel (0) target = $region17
    $region16: #{text_similarity.1} parent=1 // pred_region
      %s44 = ssub.s32 256, 256
      %45 = vsyncadd [#allocation4], %s44
      %s46 = sshll.u32 [#allocation9], 4
      %s47 = int_to_ptr.vmem [resolvable:$true] %s46
      %52 = dma.hbm_to_vmem [thread:$0]  %s3, 256, %s47, [#allocation4], 128, 128, 8
    $region17: #{text_similarity.1} parent=1 // pred_fallthru
      _
    // Predicated region
    $region18: #{text_similarity.1} parent=1 // pred_check
      _
    $region19: #{text_similarity.1} parent=1 // pred_check_branch
      %54 = sbr.rel (0) target = $region21
    $region20: #{text_similarity.1} parent=1 // pred_region
      _
    $region21: #{text_similarity.1} parent=1 // pred_fallthru
      _
    // Predicated region
    $region22: #{text_similarity.1} parent=1 // pred_check
      _
    $region23: #{text_similarity.1} parent=1 // pred_check_branch
      %56 = sbr.rel (0) target = $region25
    $region24: #{text_similarity.1} parent=1 // pred_region
      _
    $region25: #{text_similarity.1} parent=1 // pred_fallthru
      _
    // Predicated region
    $region26: #{text_similarity.1} parent=1 // pred_check
      _
    $region27: #{text_similarity.1} parent=1 // pred_check_branch
      %58 = sbr.rel (0) target = $region29
    $region28: #{text_similarity.1} parent=1 // pred_region
      _
    $region29: #{text_similarity.1} parent=1 // pred_fallthru
      _
    // Predicated region
    $region30: #{text_similarity.1} parent=1 // pred_check
      _
    $region31: #{text_similarity.1} parent=1 // pred_check_branch
      %60 = sbr.rel (0) target = $region33
    $region32: #{text_similarity.1} parent=1 // pred_region
      _
    $region33: #{text_similarity.1} parent=1 // pred_fallthru
      _
    // Predicated region
    $region34: #{text_similarity.1} parent=1 // pred_check
      _
    $region35: #{text_similarity.1} parent=1 // pred_check_branch
      %62 = sbr.rel (0) target = $region37
    $region36: #{text_similarity.1} parent=1 // pred_region
      _
    $region37: #{text_similarity.1} parent=1 // pred_fallthru
      _
    // Predicated region
    $region38: #{text_similarity.1} parent=1 // pred_check
      _
    $region39: #{text_similarity.1} parent=1 // pred_check_branch
      %64 = sbr.rel (0) target = $region41
    $region40: #{text_similarity.1} parent=1 // pred_region
      _
    $region41: #{text_similarity.1} parent=1 // pred_fallthru
      _
    // Predicated region
    $region42: #{text_similarity.1} parent=1 // pred_check
      _
    $region43: #{text_similarity.1} parent=1 // pred_check_branch
      %66 = sbr.rel (0) target = $region45
    $region44: #{text_similarity.1} parent=1 // pred_region
      %67 = dma.done [#allocation6], 16
    $region45: #{text_similarity.1} parent=1 // pred_fallthru
      _
    // Predicated region
    $region46: #{text_similarity.1} parent=1 // pred_check
      _
    $region47: #{text_similarity.1} parent=1 // pred_check_branch
      %69 = sbr.rel (0) target = $region49
    $region48: #{text_similarity.1} parent=1 // pred_region
      %70 = dma.done [#allocation8], 16
    $region49: #{text_similarity.1} parent=1 // pred_fallthru
      _
    // Predicated region
    $region50: #{text_similarity.1} parent=1 // pred_check
      _
    $region51: #{text_similarity.1} parent=1 // pred_check_branch
      %72 = sbr.rel (0) target = $region53
    $region52: #{text_similarity.1} parent=1 // pred_region
      %73 = dma.done [#allocation4], 256
    $region53: #{text_similarity.1} parent=1 // pred_fallthru
      _
    %74 = sfence
    %s75 = sld [smem:[#allocation3]]
    %s76 = scalar_lea.vmem %s2, %s75
    %v77 = vld [vmem:[%s76] sm:$0x1]
    %vm78 = vcmask 253952
    %79 = vst.msk [vmem:[#allocation2] sm:$0x1] %vm78, %v77
    %s80 = sld [smem:[#allocation7]]
    %s81 = scalar_lea.vmem %s2, %s80
    %v82 = vld [vmem:[%s81] sm:$0x1]
    %83 = vst.msk [vmem:[#allocation2 + $0x8] sm:$0x1] %vm78, %v82
    %s84 = sld [smem:[#allocation3 + $0x1]]
    %s85 = scalar_lea.vmem %s2, %s84
    %v86 = vld [vmem:[%s85] sm:$0x1]
    %87 = vst.msk [vmem:[#allocation2 + $0x1] sm:$0x1] %vm78, %v86
    %s88 = sld [smem:[#allocation7 + $0x1]]
    %s89 = scalar_lea.vmem %s2, %s88
    %v90 = vld [vmem:[%s89] sm:$0x1]
    %91 = vst.msk [vmem:[#allocation2 + $0x9] sm:$0x1] %vm78, %v90
    %s92 = sld [smem:[#allocation3 + $0x2]]
    %s93 = scalar_lea.vmem %s2, %s92
    %v94 = vld [vmem:[%s93] sm:$0x1]
    %95 = vst.msk [vmem:[#allocation2 + $0x2] sm:$0x1] %vm78, %v94
    %s96 = sld [smem:[#allocation7 + $0x2]]
    %s97 = scalar_lea.vmem %s2, %s96
    %v98 = vld [vmem:[%s97] sm:$0x1]
    %99 = vst.msk [vmem:[#allocation2 + $0xa] sm:$0x1] %vm78, %v98
    %s100 = sld [smem:[#allocation3 + $0x3]]
    %s101 = scalar_lea.vmem %s2, %s100
    %v102 = vld [vmem:[%s101] sm:$0x1]
    %103 = vst.msk [vmem:[#allocation2 + $0x3] sm:$0x1] %vm78, %v102
    %s104 = sld [smem:[#allocation7 + $0x3]]
    %s105 = scalar_lea.vmem %s2, %s104
    %v106 = vld [vmem:[%s105] sm:$0x1]
    %107 = vst.msk [vmem:[#allocation2 + $0xb] sm:$0x1] %vm78, %v106
    %s108 = sld [smem:[#allocation3 + $0x4]]
    %s109 = scalar_lea.vmem %s2, %s108
    %v110 = vld [vmem:[%s109] sm:$0x1]
    %111 = vst.msk [vmem:[#allocation2 + $0x4] sm:$0x1] %vm78, %v110
    %s112 = sld [smem:[#allocation7 + $0x4]]
    %s113 = scalar_lea.vmem %s2, %s112
    %v114 = vld [vmem:[%s113] sm:$0x1]
    %115 = vst.msk [vmem:[#allocation2 + $0xc] sm:$0x1] %vm78, %v114
    %s116 = sld [smem:[#allocation3 + $0x5]]
    %s117 = scalar_lea.vmem %s2, %s116
    %v118 = vld [vmem:[%s117] sm:$0x1]
    %119 = vst.msk [vmem:[#allocation2 + $0x5] sm:$0x1] %vm78, %v118
    %s120 = sld [smem:[#allocation7 + $0x5]]
    %s121 = scalar_lea.vmem %s2, %s120
    %v122 = vld [vmem:[%s121] sm:$0x1]
    %123 = vst.msk [vmem:[#allocation2 + $0xd] sm:$0x1] %vm78, %v122
    %s124 = sld [smem:[#allocation3 + $0x6]]
    %s125 = scalar_lea.vmem %s2, %s124
    %v126 = vld [vmem:[%s125] sm:$0x1]
    %127 = vst.msk [vmem:[#allocation2 + $0x6] sm:$0x1] %vm78, %v126
    %s128 = sld [smem:[#allocation7 + $0x6]]
    %s129 = scalar_lea.vmem %s2, %s128
    %v130 = vld [vmem:[%s129] sm:$0x1]
    %131 = vst.msk [vmem:[#allocation2 + $0xe] sm:$0x1] %vm78, %v130
    %s132 = sld [smem:[#allocation3 + $0x7]]
    %s133 = scalar_lea.vmem %s2, %s132
    %v134 = vld [vmem:[%s133] sm:$0x1]
    %135 = vst.msk [vmem:[#allocation2 + $0x7] sm:$0x1] %vm78, %v134
    %s136 = sld [smem:[#allocation7 + $0x7]]
    %s137 = scalar_lea.vmem %s2, %s136
    %v138 = vld [vmem:[%s137] sm:$0x1]
    %139 = vst.msk [vmem:[#allocation2 + $0xf] sm:$0x1] %vm78, %v138
    %v140 = vld [vmem:[#allocation2] sm:$0xff]
    %v141 = vld [vmem:[#allocation2 + $0x8] sm:$0xff]
    %v142 = vld [vmem:[#allocation9] sm:$0xff]
    %v143 = vld [vmem:[#allocation9 + $0x8] sm:$0xff]
    %v144 = vadd.f32 %v140, %v142
    %v145 = vadd.f32 %v141, %v143
    %v146 = vld [vmem:[%s9] sm:$0x1]
    %v147 = vld [vmem:[%s9 + $0x1] sm:$0x1]
    %vm148 = vcmask 261120
    %v149 = vsel %vm148, %v144, 0.0
    %150 = vadd.xlane.f32.xlu0 %v149
    %v151 = vpop.xlane.xlu0 %150
    %v152 = vsel %vm148, %v145, 0.0
    %153 = vadd.xlane.f32.xlu0 %v152
    %v154 = vpop.xlane.xlu0 %153
    %v155 = vrcp.pop 32.0
    %v156 = vmul.f32 %v151, %v155
    %v157 = vmul.f32 %v154, %v155
    %v158 = vsub.f32 %v144, %v156
    %v159 = vsub.f32 %v145, %v157
    %v160 = vmul.f32 %v158, %v158
    %v161 = vmul.f32 %v159, %v159
    %v162 = vsel %vm148, %v160, 0.0
    %163 = vadd.xlane.f32.xlu0 %v162
    %v164 = vpop.xlane.xlu0 %163
    %v165 = vsel %vm148, %v161, 0.0
    %166 = vadd.xlane.f32.xlu0 %v165
    %v167 = vpop.xlane.xlu0 %166
    %v168 = vmul.f32 %v164, %v155
    %v169 = vmul.f32 %v167, %v155
    %v170 = vadd.f32 %v168, 1e-12
    %v171 = vadd.f32 %v169, 1e-12
    %v172 = vrsqrt.pop %v170
    %v173 = vrsqrt.pop %v171
    %v174 = vmul.f32 %v158, %v172
    %v175 = vmul.f32 %v159, %v173
    %v176 = vlaneseq
    %v177 = vshrl.u32 %v176, 7
    %v178 = vsub.s32 0, %v177
    %v179 = vrot.slane %v146, %v178
    %v180 = vmul.f32 %v174, %v179
    %v181 = vmul.f32 %v175, %v179
    %v182 = vlaneseq
    %v183 = vshrl.u32 %v182, 7
    %v184 = vsub.s32 0, %v183
    %v185 = vrot.slane %v147, %v184
    %v186 = vadd.f32 %v180, %v185
    %v187 = vadd.f32 %v181, %v185
    %v188 = vlaneseq
    %v189 = vshrl.u32 %v188, 7
    %v190 = vadd.s32 %v189, 8
    %v191 = vlaneseq
    %v192 = vand.u32 %v191, 127
    %vm193 = vcmp.lt.s32.totalorder %v189, 8
    %vm194 = vcmp.lt.s32.totalorder %v190, 8
    %vm195 = vcmp.lt.s32.totalorder %v192, 8
    %vm196 = vmxor %vm193, %vm195
    %vm197 = vmxor %vm194, %vm195
    %vm198 = vmxor %vm196, 1
    %vm199 = vmxor %vm197, 1
    %v200 = vsel %vm198, 0.0, -1e+30
    %v201 = vsel %vm199, 0.0, -1e+30
    %v202 = vld [vmem:[%s4] sm:$0xff]
    %v203 = vld [vmem:[%s4 + $0x8] sm:$0xff]
    %v204 = vld [vmem:[%s4 + $0x10] sm:$0xff]
    %v205 = vld [vmem:[%s4 + $0x18] sm:$0xff]
    %v206 = vld [vmem:[%s5] sm:$0xff]
    %v207 = vld [vmem:[%s5 + $0x8] sm:$0xff]
    %v208 = vld [vmem:[%s5 + $0x10] sm:$0xff]
    %v209 = vld [vmem:[%s5 + $0x18] sm:$0xff]
    %v210 = vld [vmem:[%s9 + $0x3] sm:$0x1]
    %v211 = vlaneseq
    %v212 = vshrl.u32 %v211, 7
    %v213 = vsub.s32 0, %v212
    %v214 = vrot.slane %v210, %v213
    %v216 = vsel %vm148, %v186, 0
    %v219 = vsel %vm148, %v187, 0
    %221 = vmatprep.subr.mxu0 0.0
    %222 = vmatpush1.msra.mxu0 %v202
    %223 = vmatprep.subr.mxu0 0.0
    %224 = vmatpush1.msra.mxu0 %v203
    %225 = vmatprep.subr.mxu0 0.0
    %226 = vmatpush1.msra.mxu0 %v204
    %227 = vmatprep.subr.mxu0 0.0
    %228 = vmatpush1.msra.mxu0 %v205
    %229 = vmatprep.subr.mxu0 0.0
    %230 = vmatpush1.msra.mxu0 0.0
    %231 = vmatprep.subr.mxu0 0.0
    %232 = vmatpush1.msra.mxu0 0.0
    %233 = vmatprep.subr.mxu0 0.0
    %234 = vmatpush1.msra.mxu0 0.0
    %235 = vmatprep.subr.mxu0 0.0
    %236 = vmatpush1.msra.mxu0 0.0
    %237 = vmatprep.subr.mxu0 0.0
    %238 = vmatpush1.msra.mxu0 0.0
    %239 = vmatprep.subr.mxu0 0.0
    %240 = vmatpush1.msra.mxu0 0.0
    %241 = vmatprep.subr.mxu0 0.0
    %242 = vmatpush1.msra.mxu0 0.0
    %243 = vmatprep.subr.mxu0 0.0
    %244 = vmatpush1.msra.mxu0 0.0
    %245 = vmatprep.subr.mxu0 0.0
    %246 = vmatpush1.msra.mxu0 0.0
    %247 = vmatprep.subr.mxu0 0.0
    %248 = vmatpush1.msra.mxu0 0.0
    %249 = vmatprep.subr.mxu0 0.0
    %250 = vmatpush1.msra.mxu0 0.0
    %251 = vmatprep.subr.mxu0 0.0
    %252 = vmatpush1.msra.mxu0 0.0
    %253 = vmatprep.subr.mxu0 0.0
    %254 = vmatpush1.msra.mxu0 0.0
    %255 = vmatprep.subr.mxu0 0.0
    %256 = vmatpush1.msra.mxu0 0.0
    %257 = vmatprep.subr.mxu0 0.0
    %258 = vmatpush1.msra.mxu0 0.0
    %259 = vmatprep.subr.mxu0 0.0
    %260 = vmatpush1.msra.mxu0 0.0
    %261 = vmatprep.subr.mxu0 0.0
    %262 = vmatpush1.msra.mxu0 0.0
    %263 = vmatprep.subr.mxu0 0.0
    %264 = vmatpush1.msra.mxu0 0.0
    %265 = vmatprep.subr.mxu0 0.0
    %266 = vmatpush1.msra.mxu0 0.0
    %267 = vmatprep.subr.mxu0 0.0
    %268 = vmatpush1.msra.mxu0 0.0
    %269 = vmatprep.subr.mxu0 0.0
    %270 = vmatpush1.msra.mxu0 0.0
    %271 = vmatprep.subr.mxu0 0.0
    %272 = vmatpush1.msra.mxu0 0.0
    %273 = vmatprep.subr.mxu0 0.0
    %274 = vmatpush1.msra.mxu0 0.0
    %275 = vmatprep.subr.mxu0 0.0
    %276 = vmatpush1.msra.mxu0 0.0
    %277 = vmatprep.subr.mxu0 0.0
    %278 = vmatpush1.msra.mxu0 0.0
    %279 = vmatprep.subr.mxu0 0.0
    %280 = vmatpush1.msra.mxu0 0.0
    %281 = vmatprep.subr.mxu0 0.0
    %282 = vmatpush1.msra.mxu0 0.0
    %283 = vmatprep.subr.mxu0 0.0
    %284 = vmatpush1.msra.mxu0 0.0
    %285 = vmatprep.mubr.f32.mxu0 0.0
    %286 = vmatmul.mubr.f32.gmra.mrb[0].mxu0 %v216
    %v287 = vpop.f32.mrb[0].mxu0
    %v288 = vadd.f32 %v214, %v287
    %v289 = vpop.f32.mrb[0].mxu0
    %290 = vmatprep.mubr.f32.mxu0 0.0
    %291 = vmatmul.mubr.f32.gmra.mrb[0].mxu0 %v219
    %v292 = vpop.f32.mrb[0].mxu0
    %v293 = vadd.f32 %v214, %v292
    %v294 = vpop.f32.mrb[0].mxu0
    %295 = vdwg.mxu0
    %298 = vrot.lane.b32.xlu0 %v288, 96
    %v299 = vpop.permute.xlu0 %298
    %300 = vrot.lane.b32.xlu0 %v293, 96
    %v301 = vpop.permute.xlu0 %300
    %vm302 = vcmask 130048
    %v303 = vsel %vm302, %v288, 0
    %v305 = vsel %vm302, %v293, 0
    %v307 = vsel %vm302, %v299, 0
    %v309 = vsel %vm302, %v301, 0
    %311 = vmatprep.subr.mxu0 0.0
    %312 = vmatpush1.xpose.msra.mxu0 %v307
    %313 = vmatprep.subr.mxu0 0.0
    %314 = vmatpush1.xpose.msra.mxu0 %v309
    %315 = vmatprep.subr.mxu0 0.0
    %316 = vmatpush1.xpose.msra.mxu0 0.0
    %317 = vmatprep.subr.mxu0 0.0
    %318 = vmatpush1.xpose.msra.mxu0 0.0
    %319 = vmatprep.subr.mxu0 0.0
    %320 = vmatpush1.xpose.msra.mxu0 0.0
    %321 = vmatprep.subr.mxu0 0.0
    %322 = vmatpush1.xpose.msra.mxu0 0.0
    %323 = vmatprep.subr.mxu0 0.0
    %324 = vmatpush1.xpose.msra.mxu0 0.0
    %325 = vmatprep.subr.mxu0 0.0
    %326 = vmatpush1.xpose.msra.mxu0 0.0
    %327 = vmatprep.subr.mxu0 0.0
    %328 = vmatpush1.xpose.msra.mxu0 0.0
    %329 = vmatprep.subr.mxu0 0.0
    %330 = vmatpush1.xpose.msra.mxu0 0.0
    %331 = vmatprep.subr.mxu0 0.0
    %332 = vmatpush1.xpose.msra.mxu0 0.0
    %333 = vmatprep.subr.mxu0 0.0
    %334 = vmatpush1.xpose.msra.mxu0 0.0
    %335 = vmatprep.subr.mxu0 0.0
    %336 = vmatpush1.xpose.msra.mxu0 0.0
    %337 = vmatprep.subr.mxu0 0.0
    %338 = vmatpush1.xpose.msra.mxu0 0.0
    %339 = vmatprep.subr.mxu0 0.0
    %340 = vmatpush1.xpose.msra.mxu0 0.0
    %341 = vmatprep.subr.mxu0 0.0
    %342 = vmatpush1.xpose.msra.mxu0 0.0
    %343 = vmatprep.subr.mxu0 0.0
    %344 = vmatpush1.xpose.msra.mxu0 0.0
    %345 = vmatprep.subr.mxu0 0.0
    %346 = vmatpush1.xpose.msra.mxu0 0.0
    %347 = vmatprep.subr.mxu0 0.0
    %348 = vmatpush1.xpose.msra.mxu0 0.0
    %349 = vmatprep.subr.mxu0 0.0
    %350 = vmatpush1.xpose.msra.mxu0 0.0
    %351 = vmatprep.subr.mxu0 0.0
    %352 = vmatpush1.xpose.msra.mxu0 0.0
    %353 = vmatprep.subr.mxu0 0.0
    %354 = vmatpush1.xpose.msra.mxu0 0.0
    %355 = vmatprep.subr.mxu0 0.0
    %356 = vmatpush1.xpose.msra.mxu0 0.0
    %357 = vmatprep.subr.mxu0 0.0
    %358 = vmatpush1.xpose.msra.mxu0 0.0
    %359 = vmatprep.subr.mxu0 0.0
    %360 = vmatpush1.xpose.msra.mxu0 0.0
    %361 = vmatprep.subr.mxu0 0.0
    %362 = vmatpush1.xpose.msra.mxu0 0.0
    %363 = vmatprep.subr.mxu0 0.0
    %364 = vmatpush1.xpose.msra.mxu0 0.0
    %365 = vmatprep.subr.mxu0 0.0
    %366 = vmatpush1.xpose.msra.mxu0 0.0
    %367 = vmatprep.subr.mxu0 0.0
    %368 = vmatpush1.xpose.msra.mxu0 0.0
    %369 = vmatprep.subr.mxu0 0.0
    %370 = vmatpush1.xpose.msra.mxu0 0.0
    %371 = vmatprep.subr.mxu0 0.0
    %372 = vmatpush1.xpose.msra.mxu0 0.0
    %373 = vmatprep.subr.mxu0 0.0
    %374 = vmatpush1.xpose.msra.mxu0 0.0
    %375 = vmatprep.mubr.f32.mxu0 0.0
    %376 = vmatmul.mubr.f32.gmra.mrb[0].mxu0 %v303
    %v377 = vpop.f32.mrb[0].mxu0
    %v378 = vadd.f32 0.0, %v377
    %v379 = vpop.f32.mrb[0].mxu0
    %380 = vmatprep.mubr.f32.mxu0 0.0
    %381 = vmatmul.mubr.f32.gmra.mrb[0].mxu0 %v305
    %v382 = vpop.f32.mrb[0].mxu0
    %v383 = vadd.f32 0.0, %v382
    %v384 = vpop.f32.mrb[0].mxu0
    %385 = vdwg.mxu0
    %v386 = vmul.f32 %v378, 0.25
    %v387 = vmul.f32 %v383, 0.25
    %v388 = vadd.f32 %v386, %v200
    %v389 = vadd.f32 %v387, %v201
    %v390 = vsel %vm302, %v388, -inf
    %391 = vmax.xlane.f32.xlu0 %v390
    %v392 = vpop.xlane.xlu0 %391
    %v393 = vsel %vm302, %v389, -inf
    %394 = vmax.xlane.f32.xlu0 %v393
    %v395 = vpop.xlane.xlu0 %394
    %v396 = vsub.f32 %v388, %v392
    %v397 = vsub.f32 %v389, %v395
    %v398 = vmul.f32 %v396, 1.442695
    %v399 = vpow.pop %v398
    %v400 = vmul.f32 %v397, 1.442695
    %v401 = vpow.pop %v400
    %v402 = vsel %vm302, %v399, 0.0
    %403 = vadd.xlane.f32.xlu0 %v402
    %v404 = vpop.xlane.xlu0 %403
    %v405 = vsel %vm302, %v401, 0.0
    %406 = vadd.xlane.f32.xlu0 %v405
    %v407 = vpop.xlane.xlu0 %406
    %v408 = vrcp.pop %v404
    %v409 = vrcp.pop %v407
    %v410 = vmul.f32 %v399, %v408
    %v411 = vmul.f32 %v401, %v409
    %412 = vrot.lane.b32.xlu0 %v288, 64
    %v413 = vpop.permute.xlu0 %412
    %414 = vrot.lane.b32.xlu0 %v293, 64
    %v415 = vpop.permute.xlu0 %414
    %v419 = vsel %vm302, %v410, 0
    %v422 = vsel %vm302, %v411, 0
    %424 = vmatprep.subr.mxu0 0.0
    %425 = vmatpush1.msra.mxu0 %v413
    %426 = vmatprep.subr.mxu0 0.0
    %427 = vmatpush1.msra.mxu0 %v415
    %428 = vmatprep.subr.mxu0 0.0
    %429 = vmatpush1.msra.mxu0 0.0
    %430 = vmatprep.subr.mxu0 0.0
    %431 = vmatpush1.msra.mxu0 0.0
    %432 = vmatprep.subr.mxu0 0.0
    %433 = vmatpush1.msra.mxu0 0.0
    %434 = vmatprep.subr.mxu0 0.0
    %435 = vmatpush1.msra.mxu0 0.0
    %436 = vmatprep.subr.mxu0 0.0
    %437 = vmatpush1.msra.mxu0 0.0
    %438 = vmatprep.subr.mxu0 0.0
    %439 = vmatpush1.msra.mxu0 0.0
    %440 = vmatprep.subr.mxu0 0.0
    %441 = vmatpush1.msra.mxu0 0.0
    %442 = vmatprep.subr.mxu0 0.0
    %443 = vmatpush1.msra.mxu0 0.0
    %444 = vmatprep.subr.mxu0 0.0
    %445 = vmatpush1.msra.mxu0 0.0
    %446 = vmatprep.subr.mxu0 0.0
    %447 = vmatpush1.msra.mxu0 0.0
    %448 = vmatprep.subr.mxu0 0.0
    %449 = vmatpush1.msra.mxu0 0.0
    %450 = vmatprep.subr.mxu0 0.0
    %451 = vmatpush1.msra.mxu0 0.0
    %452 = vmatprep.subr.mxu0 0.0
    %453 = vmatpush1.msra.mxu0 0.0
    %454 = vmatprep.subr.mxu0 0.0
    %455 = vmatpush1.msra.mxu0 0.0
    %456 = vmatprep.subr.mxu0 0.0
    %457 = vmatpush1.msra.mxu0 0.0
    %458 = vmatprep.subr.mxu0 0.0
    %459 = vmatpush1.msra.mxu0 0.0
    %460 = vmatprep.subr.mxu0 0.0
    %461 = vmatpush1.msra.mxu0 0.0
    %462 = vmatprep.subr.mxu0 0.0
    %463 = vmatpush1.msra.mxu0 0.0
    %464 = vmatprep.subr.mxu0 0.0
    %465 = vmatpush1.msra.mxu0 0.0
    %466 = vmatprep.subr.mxu0 0.0
    %467 = vmatpush1.msra.mxu0 0.0
    %468 = vmatprep.subr.mxu0 0.0
    %469 = vmatpush1.msra.mxu0 0.0
    %470 = vmatprep.subr.mxu0 0.0
    %471 = vmatpush1.msra.mxu0 0.0
    %472 = vmatprep.subr.mxu0 0.0
    %473 = vmatpush1.msra.mxu0 0.0
    %474 = vmatprep.subr.mxu0 0.0
    %475 = vmatpush1.msra.mxu0 0.0
    %476 = vmatprep.subr.mxu0 0.0
    %477 = vmatpush1.msra.mxu0 0.0
    %478 = vmatprep.subr.mxu0 0.0
    %479 = vmatpush1.msra.mxu0 0.0
    %480 = vmatprep.subr.mxu0 0.0
    %481 = vmatpush1.msra.mxu0 0.0
    %482 = vmatprep.subr.mxu0 0.0
    %483 = vmatpush1.msra.mxu0 0.0
    %484 = vmatprep.subr.mxu0 0.0
    %485 = vmatpush1.msra.mxu0 0.0
    %486 = vmatprep.subr.mxu0 0.0
    %487 = vmatpush1.msra.mxu0 0.0
    %488 = vmatprep.mubr.f32.mxu0 0.0
    %489 = vmatmul.mubr.f32.gmra.mrb[0].mxu0 %v419
    %v490 = vpop.f32.mrb[0].mxu0
    %v491 = vadd.f32 0.0, %v490
    %v492 = vpop.f32.mrb[0].mxu0
    %493 = vmatprep.mubr.f32.mxu0 0.0
    %494 = vmatmul.mubr.f32.gmra.mrb[0].mxu0 %v422
    %v495 = vpop.f32.mrb[0].mxu0
    %v496 = vadd.f32 0.0, %v495
    %v497 = vpop.f32.mrb[0].mxu0
    %498 = vdwg.mxu0
    %499 = vrot.lane.b32.xlu0 %v288, 112
    %v500 = vpop.permute.xlu0 %499
    %501 = vrot.lane.b32.xlu0 %v293, 112
    %v502 = vpop.permute.xlu0 %501
    %503 = vrot.lane.b32.xlu0 %v288, 80
    %v504 = vpop.permute.xlu0 %503
    %505 = vrot.lane.b32.xlu0 %v293, 80
    %v506 = vpop.permute.xlu0 %505
    %v507 = vsel %vm302, %v500, 0
    %v509 = vsel %vm302, %v502, 0
    %v511 = vsel %vm302, %v504, 0
    %v513 = vsel %vm302, %v506, 0
    %515 = vmatprep.subr.mxu0 0.0
    %516 = vmatpush1.xpose.msra.mxu0 %v511
    %517 = vmatprep.subr.mxu0 0.0
    %518 = vmatpush1.xpose.msra.mxu0 %v513
    %519 = vmatprep.subr.mxu0 0.0
    %520 = vmatpush1.xpose.msra.mxu0 0.0
    %521 = vmatprep.subr.mxu0 0.0
    %522 = vmatpush1.xpose.msra.mxu0 0.0
    %523 = vmatprep.subr.mxu0 0.0
    %524 = vmatpush1.xpose.msra.mxu0 0.0
    %525 = vmatprep.subr.mxu0 0.0
    %526 = vmatpush1.xpose.msra.mxu0 0.0
    %527 = vmatprep.subr.mxu0 0.0
    %528 = vmatpush1.xpose.msra.mxu0 0.0
    %529 = vmatprep.subr.mxu0 0.0
    %530 = vmatpush1.xpose.msra.mxu0 0.0
    %531 = vmatprep.subr.mxu0 0.0
    %532 = vmatpush1.xpose.msra.mxu0 0.0
    %533 = vmatprep.subr.mxu0 0.0
    %534 = vmatpush1.xpose.msra.mxu0 0.0
    %535 = vmatprep.subr.mxu0 0.0
    %536 = vmatpush1.xpose.msra.mxu0 0.0
    %537 = vmatprep.subr.mxu0 0.0
    %538 = vmatpush1.xpose.msra.mxu0 0.0
    %539 = vmatprep.subr.mxu0 0.0
    %540 = vmatpush1.xpose.msra.mxu0 0.0
    %541 = vmatprep.subr.mxu0 0.0
    %542 = vmatpush1.xpose.msra.mxu0 0.0
    %543 = vmatprep.subr.mxu0 0.0
    %544 = vmatpush1.xpose.msra.mxu0 0.0
    %545 = vmatprep.subr.mxu0 0.0
    %546 = vmatpush1.xpose.msra.mxu0 0.0
    %547 = vmatprep.subr.mxu0 0.0
    %548 = vmatpush1.xpose.msra.mxu0 0.0
    %549 = vmatprep.subr.mxu0 0.0
    %550 = vmatpush1.xpose.msra.mxu0 0.0
    %551 = vmatprep.subr.mxu0 0.0
    %552 = vmatpush1.xpose.msra.mxu0 0.0
    %553 = vmatprep.subr.mxu0 0.0
    %554 = vmatpush1.xpose.msra.mxu0 0.0
    %555 = vmatprep.subr.mxu0 0.0
    %556 = vmatpush1.xpose.msra.mxu0 0.0
    %557 = vmatprep.subr.mxu0 0.0
    %558 = vmatpush1.xpose.msra.mxu0 0.0
    %559 = vmatprep.subr.mxu0 0.0
    %560 = vmatpush1.xpose.msra.mxu0 0.0
    %561 = vmatprep.subr.mxu0 0.0
    %562 = vmatpush1.xpose.msra.mxu0 0.0
    %563 = vmatprep.subr.mxu0 0.0
    %564 = vmatpush1.xpose.msra.mxu0 0.0
    %565 = vmatprep.subr.mxu0 0.0
    %566 = vmatpush1.xpose.msra.mxu0 0.0
    %567 = vmatprep.subr.mxu0 0.0
    %568 = vmatpush1.xpose.msra.mxu0 0.0
    %569 = vmatprep.subr.mxu0 0.0
    %570 = vmatpush1.xpose.msra.mxu0 0.0
    %571 = vmatprep.subr.mxu0 0.0
    %572 = vmatpush1.xpose.msra.mxu0 0.0
    %573 = vmatprep.subr.mxu0 0.0
    %574 = vmatpush1.xpose.msra.mxu0 0.0
    %575 = vmatprep.subr.mxu0 0.0
    %576 = vmatpush1.xpose.msra.mxu0 0.0
    %577 = vmatprep.subr.mxu0 0.0
    %578 = vmatpush1.xpose.msra.mxu0 0.0
    %579 = vmatprep.mubr.f32.mxu0 0.0
    %580 = vmatmul.mubr.f32.gmra.mrb[0].mxu0 %v507
    %v581 = vpop.f32.mrb[0].mxu0
    %v582 = vadd.f32 0.0, %v581
    %v583 = vpop.f32.mrb[0].mxu0
    %584 = vmatprep.mubr.f32.mxu0 0.0
    %585 = vmatmul.mubr.f32.gmra.mrb[0].mxu0 %v509
    %v586 = vpop.f32.mrb[0].mxu0
    %v587 = vadd.f32 0.0, %v586
    %v588 = vpop.f32.mrb[0].mxu0
    %589 = vdwg.mxu0
    %v590 = vmul.f32 %v582, 0.25
    %v591 = vmul.f32 %v587, 0.25
    %v592 = vadd.f32 %v590, %v200
    %v593 = vadd.f32 %v591, %v201
    %v594 = vsel %vm302, %v592, -inf
    %595 = vmax.xlane.f32.xlu0 %v594
    %v596 = vpop.xlane.xlu0 %595
    %v597 = vsel %vm302, %v593, -inf
    %598 = vmax.xlane.f32.xlu0 %v597
    %v599 = vpop.xlane.xlu0 %598
    %v600 = vsub.f32 %v592, %v596
    %v601 = vsub.f32 %v593, %v599
    %v602 = vmul.f32 %v600, 1.442695
    %v603 = vpow.pop %v602
    %v604 = vmul.f32 %v601, 1.442695
    %v605 = vpow.pop %v604
    %v606 = vsel %vm302, %v603, 0.0
    %607 = vadd.xlane.f32.xlu0 %v606
    %v608 = vpop.xlane.xlu0 %607
    %v609 = vsel %vm302, %v605, 0.0
    %610 = vadd.xlane.f32.xlu0 %v609
    %v611 = vpop.xlane.xlu0 %610
    %v612 = vrcp.pop %v608
    %v613 = vrcp.pop %v611
    %v614 = vmul.f32 %v603, %v612
    %v615 = vmul.f32 %v605, %v613
    %616 = vrot.lane.b32.xlu0 %v288, 48
    %v617 = vpop.permute.xlu0 %616
    %618 = vrot.lane.b32.xlu0 %v293, 48
    %v619 = vpop.permute.xlu0 %618
    %v623 = vsel %vm302, %v614, 0
    %v626 = vsel %vm302, %v615, 0
    %628 = vmatprep.subr.mxu0 0.0
    %629 = vmatpush1.msra.mxu0 %v617
    %630 = vmatprep.subr.mxu0 0.0
    %631 = vmatpush1.msra.mxu0 %v619
    %632 = vmatprep.subr.mxu0 0.0
    %633 = vmatpush1.msra.mxu0 0.0
    %634 = vmatprep.subr.mxu0 0.0
    %635 = vmatpush1.msra.mxu0 0.0
    %636 = vmatprep.subr.mxu0 0.0
    %637 = vmatpush1.msra.mxu0 0.0
    %638 = vmatprep.subr.mxu0 0.0
    %639 = vmatpush1.msra.mxu0 0.0
    %640 = vmatprep.subr.mxu0 0.0
    %641 = vmatpush1.msra.mxu0 0.0
    %642 = vmatprep.subr.mxu0 0.0
    %643 = vmatpush1.msra.mxu0 0.0
    %644 = vmatprep.subr.mxu0 0.0
    %645 = vmatpush1.msra.mxu0 0.0
    %646 = vmatprep.subr.mxu0 0.0
    %647 = vmatpush1.msra.mxu0 0.0
    %648 = vmatprep.subr.mxu0 0.0
    %649 = vmatpush1.msra.mxu0 0.0
    %650 = vmatprep.subr.mxu0 0.0
    %651 = vmatpush1.msra.mxu0 0.0
    %652 = vmatprep.subr.mxu0 0.0
    %653 = vmatpush1.msra.mxu0 0.0
    %654 = vmatprep.subr.mxu0 0.0
    %655 = vmatpush1.msra.mxu0 0.0
    %656 = vmatprep.subr.mxu0 0.0
    %657 = vmatpush1.msra.mxu0 0.0
    %658 = vmatprep.subr.mxu0 0.0
    %659 = vmatpush1.msra.mxu0 0.0
    %660 = vmatprep.subr.mxu0 0.0
    %661 = vmatpush1.msra.mxu0 0.0
    %662 = vmatprep.subr.mxu0 0.0
    %663 = vmatpush1.msra.mxu0 0.0
    %664 = vmatprep.subr.mxu0 0.0
    %665 = vmatpush1.msra.mxu0 0.0
    %666 = vmatprep.subr.mxu0 0.0
    %667 = vmatpush1.msra.mxu0 0.0
    %668 = vmatprep.subr.mxu0 0.0
    %669 = vmatpush1.msra.mxu0 0.0
    %670 = vmatprep.subr.mxu0 0.0
    %671 = vmatpush1.msra.mxu0 0.0
    %672 = vmatprep.subr.mxu0 0.0
    %673 = vmatpush1.msra.mxu0 0.0
    %674 = vmatprep.subr.mxu0 0.0
    %675 = vmatpush1.msra.mxu0 0.0
    %676 = vmatprep.subr.mxu0 0.0
    %677 = vmatpush1.msra.mxu0 0.0
    %678 = vmatprep.subr.mxu0 0.0
    %679 = vmatpush1.msra.mxu0 0.0
    %680 = vmatprep.subr.mxu0 0.0
    %681 = vmatpush1.msra.mxu0 0.0
    %682 = vmatprep.subr.mxu0 0.0
    %683 = vmatpush1.msra.mxu0 0.0
    %684 = vmatprep.subr.mxu0 0.0
    %685 = vmatpush1.msra.mxu0 0.0
    %686 = vmatprep.subr.mxu0 0.0
    %687 = vmatpush1.msra.mxu0 0.0
    %688 = vmatprep.subr.mxu0 0.0
    %689 = vmatpush1.msra.mxu0 0.0
    %690 = vmatprep.subr.mxu0 0.0
    %691 = vmatpush1.msra.mxu0 0.0
    %692 = vmatprep.mubr.f32.mxu0 0.0
    %693 = vmatmul.mubr.f32.gmra.mrb[0].mxu0 %v623
    %v694 = vpop.f32.mrb[0].mxu0
    %v695 = vadd.f32 0.0, %v694
    %v696 = vpop.f32.mrb[0].mxu0
    %697 = vmatprep.mubr.f32.mxu0 0.0
    %698 = vmatmul.mubr.f32.gmra.mrb[0].mxu0 %v626
    %v699 = vpop.f32.mrb[0].mxu0
    %v700 = vadd.f32 0.0, %v699
    %v701 = vpop.f32.mrb[0].mxu0
    %702 = vdwg.mxu0
    %v704 = vsel %vm302, %v695, 0
    %v707 = vsel %vm302, %v700, 0
    %709 = vmatprep.subr.mxu0 0.0
    %710 = vmatpush1.msra.mxu0 %v208
    %711 = vmatprep.subr.mxu0 0.0
    %712 = vmatpush1.msra.mxu0 %v209
    %713 = vmatprep.subr.mxu0 0.0
    %714 = vmatpush1.msra.mxu0 0.0
    %715 = vmatprep.subr.mxu0 0.0
    %716 = vmatpush1.msra.mxu0 0.0
    %717 = vmatprep.subr.mxu0 0.0
    %718 = vmatpush1.msra.mxu0 0.0
    %719 = vmatprep.subr.mxu0 0.0
    %720 = vmatpush1.msra.mxu0 0.0
    %721 = vmatprep.subr.mxu0 0.0
    %722 = vmatpush1.msra.mxu0 0.0
    %723 = vmatprep.subr.mxu0 0.0
    %724 = vmatpush1.msra.mxu0 0.0
    %725 = vmatprep.subr.mxu0 0.0
    %726 = vmatpush1.msra.mxu0 0.0
    %727 = vmatprep.subr.mxu0 0.0
    %728 = vmatpush1.msra.mxu0 0.0
    %729 = vmatprep.subr.mxu0 0.0
    %730 = vmatpush1.msra.mxu0 0.0
    %731 = vmatprep.subr.mxu0 0.0
    %732 = vmatpush1.msra.mxu0 0.0
    %733 = vmatprep.subr.mxu0 0.0
    %734 = vmatpush1.msra.mxu0 0.0
    %735 = vmatprep.subr.mxu0 0.0
    %736 = vmatpush1.msra.mxu0 0.0
    %737 = vmatprep.subr.mxu0 0.0
    %738 = vmatpush1.msra.mxu0 0.0
    %739 = vmatprep.subr.mxu0 0.0
    %740 = vmatpush1.msra.mxu0 0.0
    %741 = vmatprep.subr.mxu0 0.0
    %742 = vmatpush1.msra.mxu0 0.0
    %743 = vmatprep.subr.mxu0 0.0
    %744 = vmatpush1.msra.mxu0 0.0
    %745 = vmatprep.subr.mxu0 0.0
    %746 = vmatpush1.msra.mxu0 0.0
    %747 = vmatprep.subr.mxu0 0.0
    %748 = vmatpush1.msra.mxu0 0.0
    %749 = vmatprep.subr.mxu0 0.0
    %750 = vmatpush1.msra.mxu0 0.0
    %751 = vmatprep.subr.mxu0 0.0
    %752 = vmatpush1.msra.mxu0 0.0
    %753 = vmatprep.subr.mxu0 0.0
    %754 = vmatpush1.msra.mxu0 0.0
    %755 = vmatprep.subr.mxu0 0.0
    %756 = vmatpush1.msra.mxu0 0.0
    %757 = vmatprep.subr.mxu0 0.0
    %758 = vmatpush1.msra.mxu0 0.0
    %759 = vmatprep.subr.mxu0 0.0
    %760 = vmatpush1.msra.mxu0 0.0
    %761 = vmatprep.subr.mxu0 0.0
    %762 = vmatpush1.msra.mxu0 0.0
    %763 = vmatprep.subr.mxu0 0.0
    %764 = vmatpush1.msra.mxu0 0.0
    %765 = vmatprep.subr.mxu0 0.0
    %766 = vmatpush1.msra.mxu0 0.0
    %767 = vmatprep.subr.mxu0 0.0
    %768 = vmatpush1.msra.mxu0 0.0
    %769 = vmatprep.subr.mxu0 0.0
    %770 = vmatpush1.msra.mxu0 0.0
    %771 = vmatprep.subr.mxu0 0.0
    %772 = vmatpush1.msra.mxu0 0.0
    %773 = vmatprep.mubr.f32.mxu0 0.0
    %774 = vmatmul.mubr.f32.gmra.mrb[0].mxu0 %v704
    %v775 = vpop.f32.mrb[0].mxu0
    %v776 = vadd.f32 0.0, %v775
    %v777 = vpop.f32.mrb[0].mxu0
    %778 = vmatprep.mubr.f32.mxu0 0.0
    %779 = vmatmul.mubr.f32.gmra.mrb[0].mxu0 %v707
    %v780 = vpop.f32.mrb[0].mxu0
    %v781 = vadd.f32 0.0, %v780
    %v782 = vpop.f32.mrb[0].mxu0
    %783 = vdwg.mxu0
    %v785 = vsel %vm302, %v491, 0
    %v788 = vsel %vm302, %v496, 0
    %790 = vmatprep.subr.mxu0 0.0
    %791 = vmatpush1.msra.mxu0 %v206
    %792 = vmatprep.subr.mxu0 0.0
    %793 = vmatpush1.msra.mxu0 %v207
    %794 = vmatprep.subr.mxu0 0.0
    %795 = vmatpush1.msra.mxu0 0.0
    %796 = vmatprep.subr.mxu0 0.0
    %797 = vmatpush1.msra.mxu0 0.0
    %798 = vmatprep.subr.mxu0 0.0
    %799 = vmatpush1.msra.mxu0 0.0
    %800 = vmatprep.subr.mxu0 0.0
    %801 = vmatpush1.msra.mxu0 0.0
    %802 = vmatprep.subr.mxu0 0.0
    %803 = vmatpush1.msra.mxu0 0.0
    %804 = vmatprep.subr.mxu0 0.0
    %805 = vmatpush1.msra.mxu0 0.0
    %806 = vmatprep.subr.mxu0 0.0
    %807 = vmatpush1.msra.mxu0 0.0
    %808 = vmatprep.subr.mxu0 0.0
    %809 = vmatpush1.msra.mxu0 0.0
    %810 = vmatprep.subr.mxu0 0.0
    %811 = vmatpush1.msra.mxu0 0.0
    %812 = vmatprep.subr.mxu0 0.0
    %813 = vmatpush1.msra.mxu0 0.0
    %814 = vmatprep.subr.mxu0 0.0
    %815 = vmatpush1.msra.mxu0 0.0
    %816 = vmatprep.subr.mxu0 0.0
    %817 = vmatpush1.msra.mxu0 0.0
    %818 = vmatprep.subr.mxu0 0.0
    %819 = vmatpush1.msra.mxu0 0.0
    %820 = vmatprep.subr.mxu0 0.0
    %821 = vmatpush1.msra.mxu0 0.0
    %822 = vmatprep.subr.mxu0 0.0
    %823 = vmatpush1.msra.mxu0 0.0
    %824 = vmatprep.subr.mxu0 0.0
    %825 = vmatpush1.msra.mxu0 0.0
    %826 = vmatprep.subr.mxu0 0.0
    %827 = vmatpush1.msra.mxu0 0.0
    %828 = vmatprep.subr.mxu0 0.0
    %829 = vmatpush1.msra.mxu0 0.0
    %830 = vmatprep.subr.mxu0 0.0
    %831 = vmatpush1.msra.mxu0 0.0
    %832 = vmatprep.subr.mxu0 0.0
    %833 = vmatpush1.msra.mxu0 0.0
    %834 = vmatprep.subr.mxu0 0.0
    %835 = vmatpush1.msra.mxu0 0.0
    %836 = vmatprep.subr.mxu0 0.0
    %837 = vmatpush1.msra.mxu0 0.0
    %838 = vmatprep.subr.mxu0 0.0
    %839 = vmatpush1.msra.mxu0 0.0
    %840 = vmatprep.subr.mxu0 0.0
    %841 = vmatpush1.msra.mxu0 0.0
    %842 = vmatprep.subr.mxu0 0.0
    %843 = vmatpush1.msra.mxu0 0.0
    %844 = vmatprep.subr.mxu0 0.0
    %845 = vmatpush1.msra.mxu0 0.0
    %846 = vmatprep.subr.mxu0 0.0
    %847 = vmatpush1.msra.mxu0 0.0
    %848 = vmatprep.subr.mxu0 0.0
    %849 = vmatpush1.msra.mxu0 0.0
    %850 = vmatprep.subr.mxu0 0.0
    %851 = vmatpush1.msra.mxu0 0.0
    %852 = vmatprep.subr.mxu0 0.0
    %853 = vmatpush1.msra.mxu0 0.0
    %854 = vmatprep.mubr.f32.mxu0 0.0
    %855 = vmatmul.mubr.f32.gmra.mrb[0].mxu0 %v785
    %v856 = vpop.f32.mrb[0].mxu0
    %v857 = vadd.f32 %v776, %v856
    %v858 = vpop.f32.mrb[0].mxu0
    %859 = vmatprep.mubr.f32.mxu0 0.0
    %860 = vmatmul.mubr.f32.gmra.mrb[0].mxu0 %v788
    %v861 = vpop.f32.mrb[0].mxu0
    %v862 = vadd.f32 %v781, %v861
    %v863 = vpop.f32.mrb[0].mxu0
    %864 = vdwg.mxu0
    %v865 = vld [vmem:[%s9 + $0x4] sm:$0x1]
    %v866 = vlaneseq
    %v867 = vshrl.u32 %v866, 7
    %v868 = vsub.s32 0, %v867
    %v869 = vrot.slane %v865, %v868
    %v870 = vadd.f32 %v857, %v869
    %v871 = vadd.f32 %v862, %v869
    %v872 = vadd.f32 %v186, %v870
    %v873 = vadd.f32 %v187, %v871
    %v874 = vld [vmem:[%s9 + $0x7] sm:$0x1]
    %v875 = vld [vmem:[%s9 + $0x8] sm:$0x1]
    %v876 = vsel %vm148, %v872, 0.0
    %877 = vadd.xlane.f32.xlu0 %v876
    %v878 = vpop.xlane.xlu0 %877
    %v879 = vsel %vm148, %v873, 0.0
    %880 = vadd.xlane.f32.xlu0 %v879
    %v881 = vpop.xlane.xlu0 %880
    %v882 = vmul.f32 %v878, %v155
    %v883 = vmul.f32 %v881, %v155
    %v884 = vsub.f32 %v872, %v882
    %v885 = vsub.f32 %v873, %v883
    %v886 = vmul.f32 %v884, %v884
    %v887 = vmul.f32 %v885, %v885
    %v888 = vsel %vm148, %v886, 0.0
    %889 = vadd.xlane.f32.xlu0 %v888
    %v890 = vpop.xlane.xlu0 %889
    %v891 = vsel %vm148, %v887, 0.0
    %892 = vadd.xlane.f32.xlu0 %v891
    %v893 = vpop.xlane.xlu0 %892
    %v894 = vmul.f32 %v890, %v155
    %v895 = vmul.f32 %v893, %v155
    %v896 = vadd.f32 %v894, 1e-12
    %v897 = vadd.f32 %v895, 1e-12
    %v898 = vrsqrt.pop %v896
    %v899 = vrsqrt.pop %v897
    %v900 = vmul.f32 %v884, %v898
    %v901 = vmul.f32 %v885, %v899
    %v902 = vlaneseq
    %v903 = vshrl.u32 %v902, 7
    %v904 = vsub.s32 0, %v903
    %v905 = vrot.slane %v874, %v904
    %v906 = vmul.f32 %v900, %v905
    %v907 = vmul.f32 %v901, %v905
    %v908 = vlaneseq
    %v909 = vshrl.u32 %v908, 7
    %v910 = vsub.s32 0, %v909
    %v911 = vrot.slane %v875, %v910
    %v912 = vadd.f32 %v906, %v911
    %v913 = vadd.f32 %v907, %v911
    %v914 = vld [vmem:[%s6] sm:$0xff]
    %v915 = vld [vmem:[%s6 + $0x8] sm:$0xff]
    %v916 = vld [vmem:[%s6 + $0x10] sm:$0xff]
    %v917 = vld [vmem:[%s6 + $0x18] sm:$0xff]
    %v918 = vld [vmem:[%s9 + $0x5] sm:$0x1]
    %v919 = vlaneseq
    %v920 = vshrl.u32 %v919, 7
    %v921 = vsub.s32 0, %v920
    %v922 = vrot.slane %v918, %v921
    %v924 = vsel %vm148, %v912, 0
    %v927 = vsel %vm148, %v913, 0
    %929 = vmatprep.subr.mxu0 0.0
    %930 = vmatpush1.msra.mxu0 %v914
    %931 = vmatprep.subr.mxu0 0.0
    %932 = vmatpush1.msra.mxu0 %v915
    %933 = vmatprep.subr.mxu0 0.0
    %934 = vmatpush1.msra.mxu0 %v916
    %935 = vmatprep.subr.mxu0 0.0
    %936 = vmatpush1.msra.mxu0 %v917
    %937 = vmatprep.subr.mxu0 0.0
    %938 = vmatpush1.msra.mxu0 0.0
    %939 = vmatprep.subr.mxu0 0.0
    %940 = vmatpush1.msra.mxu0 0.0
    %941 = vmatprep.subr.mxu0 0.0
    %942 = vmatpush1.msra.mxu0 0.0
    %943 = vmatprep.subr.mxu0 0.0
    %944 = vmatpush1.msra.mxu0 0.0
    %945 = vmatprep.subr.mxu0 0.0
    %946 = vmatpush1.msra.mxu0 0.0
    %947 = vmatprep.subr.mxu0 0.0
    %948 = vmatpush1.msra.mxu0 0.0
    %949 = vmatprep.subr.mxu0 0.0
    %950 = vmatpush1.msra.mxu0 0.0
    %951 = vmatprep.subr.mxu0 0.0
    %952 = vmatpush1.msra.mxu0 0.0
    %953 = vmatprep.subr.mxu0 0.0
    %954 = vmatpush1.msra.mxu0 0.0
    %955 = vmatprep.subr.mxu0 0.0
    %956 = vmatpush1.msra.mxu0 0.0
    %957 = vmatprep.subr.mxu0 0.0
    %958 = vmatpush1.msra.mxu0 0.0
    %959 = vmatprep.subr.mxu0 0.0
    %960 = vmatpush1.msra.mxu0 0.0
    %961 = vmatprep.subr.mxu0 0.0
    %962 = vmatpush1.msra.mxu0 0.0
    %963 = vmatprep.subr.mxu0 0.0
    %964 = vmatpush1.msra.mxu0 0.0
    %965 = vmatprep.subr.mxu0 0.0
    %966 = vmatpush1.msra.mxu0 0.0
    %967 = vmatprep.subr.mxu0 0.0
    %968 = vmatpush1.msra.mxu0 0.0
    %969 = vmatprep.subr.mxu0 0.0
    %970 = vmatpush1.msra.mxu0 0.0
    %971 = vmatprep.subr.mxu0 0.0
    %972 = vmatpush1.msra.mxu0 0.0
    %973 = vmatprep.subr.mxu0 0.0
    %974 = vmatpush1.msra.mxu0 0.0
    %975 = vmatprep.subr.mxu0 0.0
    %976 = vmatpush1.msra.mxu0 0.0
    %977 = vmatprep.subr.mxu0 0.0
    %978 = vmatpush1.msra.mxu0 0.0
    %979 = vmatprep.subr.mxu0 0.0
    %980 = vmatpush1.msra.mxu0 0.0
    %981 = vmatprep.subr.mxu0 0.0
    %982 = vmatpush1.msra.mxu0 0.0
    %983 = vmatprep.subr.mxu0 0.0
    %984 = vmatpush1.msra.mxu0 0.0
    %985 = vmatprep.subr.mxu0 0.0
    %986 = vmatpush1.msra.mxu0 0.0
    %987 = vmatprep.subr.mxu0 0.0
    %988 = vmatpush1.msra.mxu0 0.0
    %989 = vmatprep.subr.mxu0 0.0
    %990 = vmatpush1.msra.mxu0 0.0
    %991 = vmatprep.subr.mxu0 0.0
    %992 = vmatpush1.msra.mxu0 0.0
    %993 = vmatprep.mubr.f32.mxu0 0.0
    %994 = vmatmul.mubr.f32.gmra.mrb[0].mxu0 %v924
    %v995 = vpop.f32.mrb[0].mxu0
    %v996 = vadd.f32 %v922, %v995
    %v997 = vpop.f32.mrb[0].mxu0
    %998 = vmatprep.mubr.f32.mxu0 0.0
    %999 = vmatmul.mubr.f32.gmra.mrb[0].mxu0 %v927
    %v1000 = vpop.f32.mrb[0].mxu0
    %v1001 = vadd.f32 %v922, %v1000
    %v1002 = vpop.f32.mrb[0].mxu0
    %1003 = vdwg.mxu0
    %v1004 = vmul.f32 %v996, %v996
    %v1005 = vmul.f32 %v1001, %v1001
    %v1006 = vmul.f32 %v996, %v1004
    %v1007 = vmul.f32 %v1001, %v1005
    %v1008 = vmul.f32 %v1006, 0.044715
    %v1009 = vmul.f32 %v1007, 0.044715
    %v1010 = vadd.f32 %v996, %v1008
    %v1011 = vadd.f32 %v1001, %v1009
    %v1012 = vmul.f32 %v1010, 0.7978846
    %v1013 = vmul.f32 %v1011, 0.7978846
    %v1014 = vtanh.pop %v1012
    %v1015 = vtanh.pop %v1013
    %v1016 = vadd.f32 %v1014, 1.0
    %v1017 = vadd.f32 %v1015, 1.0
    %v1018 = vmul.f32 %v1016, 0.5
    %v1019 = vmul.f32 %v1017, 0.5
    %v1020 = vmul.f32 %v996, %v1018
    %v1021 = vmul.f32 %v1001, %v1019
    %v1022 = vld [vmem:[%s7] sm:$0xff]
    %v1023 = vld [vmem:[%s7 + $0x8] sm:$0xff]
    %v1024 = vld [vmem:[%s7 + $0x10] sm:$0xff]
    %v1025 = vld [vmem:[%s7 + $0x18] sm:$0xff]
    %v1026 = vld [vmem:[%s7 + $0x20] sm:$0xff]
    %v1027 = vld [vmem:[%s7 + $0x28] sm:$0xff]
    %v1028 = vld [vmem:[%s7 + $0x30] sm:$0xff]
    %v1029 = vld [vmem:[%s7 + $0x38] sm:$0xff]
    %v1030 = vld [vmem:[%s9 + $0x6] sm:$0x1]
    %v1031 = vlaneseq
    %v1032 = vshrl.u32 %v1031, 7
    %v1033 = vsub.s32 0, %v1032
    %v1034 = vrot.slane %v1030, %v1033
    %vm1035 = vcmask 523264
    %v1037 = vsel %vm1035, %v1020, 0
    %v1040 = vsel %vm1035, %v1021, 0
    %1042 = vmatprep.subr.mxu0 0.0
    %1043 = vmatpush1.msra.mxu0 %v1022
    %1044 = vmatprep.subr.mxu0 0.0
    %1045 = vmatpush1.msra.mxu0 %v1023
    %1046 = vmatprep.subr.mxu0 0.0
    %1047 = vmatpush1.msra.mxu0 %v1024
    %1048 = vmatprep.subr.mxu0 0.0
    %1049 = vmatpush1.msra.mxu0 %v1025
    %1050 = vmatprep.subr.mxu0 0.0
    %1051 = vmatpush1.msra.mxu0 %v1026
    %1052 = vmatprep.subr.mxu0 0.0
    %1053 = vmatpush1.msra.mxu0 %v1027
    %1054 = vmatprep.subr.mxu0 0.0
    %1055 = vmatpush1.msra.mxu0 %v1028
    %1056 = vmatprep.subr.mxu0 0.0
    %1057 = vmatpush1.msra.mxu0 %v1029
    %1058 = vmatprep.subr.mxu0 0.0
    %1059 = vmatpush1.msra.mxu0 0.0
    %1060 = vmatprep.subr.mxu0 0.0
    %1061 = vmatpush1.msra.mxu0 0.0
    %1062 = vmatprep.subr.mxu0 0.0
    %1063 = vmatpush1.msra.mxu0 0.0
    %1064 = vmatprep.subr.mxu0 0.0
    %1065 = vmatpush1.msra.mxu0 0.0
    %1066 = vmatprep.subr.mxu0 0.0
    %1067 = vmatpush1.msra.mxu0 0.0
    %1068 = vmatprep.subr.mxu0 0.0
    %1069 = vmatpush1.msra.mxu0 0.0
    %1070 = vmatprep.subr.mxu0 0.0
    %1071 = vmatpush1.msra.mxu0 0.0
    %1072 = vmatprep.subr.mxu0 0.0
    %1073 = vmatpush1.msra.mxu0 0.0
    %1074 = vmatprep.subr.mxu0 0.0
    %1075 = vmatpush1.msra.mxu0 0.0
    %1076 = vmatprep.subr.mxu0 0.0
    %1077 = vmatpush1.msra.mxu0 0.0
    %1078 = vmatprep.subr.mxu0 0.0
    %1079 = vmatpush1.msra.mxu0 0.0
    %1080 = vmatprep.subr.mxu0 0.0
    %1081 = vmatpush1.msra.mxu0 0.0
    %1082 = vmatprep.subr.mxu0 0.0
    %1083 = vmatpush1.msra.mxu0 0.0
    %1084 = vmatprep.subr.mxu0 0.0
    %1085 = vmatpush1.msra.mxu0 0.0
    %1086 = vmatprep.subr.mxu0 0.0
    %1087 = vmatpush1.msra.mxu0 0.0
    %1088 = vmatprep.subr.mxu0 0.0
    %1089 = vmatpush1.msra.mxu0 0.0
    %1090 = vmatprep.subr.mxu0 0.0
    %1091 = vmatpush1.msra.mxu0 0.0
    %1092 = vmatprep.subr.mxu0 0.0
    %1093 = vmatpush1.msra.mxu0 0.0
    %1094 = vmatprep.subr.mxu0 0.0
    %1095 = vmatpush1.msra.mxu0 0.0
    %1096 = vmatprep.subr.mxu0 0.0
    %1097 = vmatpush1.msra.mxu0 0.0
    %1098 = vmatprep.subr.mxu0 0.0
    %1099 = vmatpush1.msra.mxu0 0.0
    %1100 = vmatprep.subr.mxu0 0.0
    %1101 = vmatpush1.msra.mxu0 0.0
    %1102 = vmatprep.subr.mxu0 0.0
    %1103 = vmatpush1.msra.mxu0 0.0
    %1104 = vmatprep.subr.mxu0 0.0
    %1105 = vmatpush1.msra.mxu0 0.0
    %1106 = vmatprep.mubr.f32.mxu0 0.0
    %1107 = vmatmul.mubr.f32.gmra.mrb[0].mxu0 %v1037
    %v1108 = vpop.f32.mrb[0].mxu0
    %v1109 = vadd.f32 %v1034, %v1108
    %v1110 = vpop.f32.mrb[0].mxu0
    %1111 = vmatprep.mubr.f32.mxu0 0.0
    %1112 = vmatmul.mubr.f32.gmra.mrb[0].mxu0 %v1040
    %v1113 = vpop.f32.mrb[0].mxu0
    %v1114 = vadd.f32 %v1034, %v1113
    %v1115 = vpop.f32.mrb[0].mxu0
    %1116 = vdwg.mxu0
    %v1117 = vadd.f32 %v912, %v1109
    %v1118 = vadd.f32 %v913, %v1114
    %v1119 = vld [vmem:[%s9 + $0x9] sm:$0x1]
    %v1120 = vld [vmem:[%s9 + $0xa] sm:$0x1]
    %v1121 = vsel %vm148, %v1117, 0.0
    %1122 = vadd.xlane.f32.xlu0 %v1121
    %v1123 = vpop.xlane.xlu0 %1122
    %v1124 = vsel %vm148, %v1118, 0.0
    %1125 = vadd.xlane.f32.xlu0 %v1124
    %v1126 = vpop.xlane.xlu0 %1125
    %v1127 = vmul.f32 %v1123, %v155
    %v1128 = vmul.f32 %v1126, %v155
    %v1129 = vsub.f32 %v1117, %v1127
    %v1130 = vsub.f32 %v1118, %v1128
    %v1131 = vmul.f32 %v1129, %v1129
    %v1132 = vmul.f32 %v1130, %v1130
    %v1133 = vsel %vm148, %v1131, 0.0
    %1134 = vadd.xlane.f32.xlu0 %v1133
    %v1135 = vpop.xlane.xlu0 %1134
    %v1136 = vsel %vm148, %v1132, 0.0
    %1137 = vadd.xlane.f32.xlu0 %v1136
    %v1138 = vpop.xlane.xlu0 %1137
    %v1139 = vmul.f32 %v1135, %v155
    %v1140 = vmul.f32 %v1138, %v155
    %v1141 = vadd.f32 %v1139, 1e-12
    %v1142 = vadd.f32 %v1140, 1e-12
    %v1143 = vrsqrt.pop %v1141
    %v1144 = vrsqrt.pop %v1142
    %v1145 = vmul.f32 %v1129, %v1143
    %v1146 = vmul.f32 %v1130, %v1144
    %v1147 = vlaneseq
    %v1148 = vshrl.u32 %v1147, 7
    %v1149 = vsub.s32 0, %v1148
    %v1150 = vrot.slane %v1119, %v1149
    %v1151 = vmul.f32 %v1145, %v1150
    %v1152 = vmul.f32 %v1146, %v1150
    %v1153 = vlaneseq
    %v1154 = vshrl.u32 %v1153, 7
    %v1155 = vsub.s32 0, %v1154
    %v1156 = vrot.slane %v1120, %v1155
    %v1157 = vadd.f32 %v1151, %v1156
    %v1158 = vadd.f32 %v1152, %v1156
    %s1159 = scalar_lea.vmem %s4, 32
    %v1160 = vld [vmem:[%s1159] sm:$0xff]
    %v1161 = vld [vmem:[%s1159 + $0x8] sm:$0xff]
    %v1162 = vld [vmem:[%s1159 + $0x10] sm:$0xff]
    %v1163 = vld [vmem:[%s1159 + $0x18] sm:$0xff]
    %s1164 = scalar_lea.vmem %s5, 32
    %v1165 = vld [vmem:[%s1164] sm:$0xff]
    %v1166 = vld [vmem:[%s1164 + $0x8] sm:$0xff]
    %v1167 = vld [vmem:[%s1164 + $0x10] sm:$0xff]
    %v1168 = vld [vmem:[%s1164 + $0x18] sm:$0xff]
    %v1169 = vld [vmem:[%s9 + $0xb] sm:$0x1]
    %v1170 = vlaneseq
    %v1171 = vshrl.u32 %v1170, 7
    %v1172 = vsub.s32 0, %v1171
    %v1173 = vrot.slane %v1169, %v1172
    %v1175 = vsel %vm148, %v1157, 0
    %v1178 = vsel %vm148, %v1158, 0
    %1180 = vmatprep.subr.mxu0 0.0
    %1181 = vmatpush1.msra.mxu0 %v1160
    %1182 = vmatprep.subr.mxu0 0.0
    %1183 = vmatpush1.msra.mxu0 %v1161
    %1184 = vmatprep.subr.mxu0 0.0
    %1185 = vmatpush1.msra.mxu0 %v1162
    %1186 = vmatprep.subr.mxu0 0.0
    %1187 = vmatpush1.msra.mxu0 %v1163
    %1188 = vmatprep.subr.mxu0 0.0
    %1189 = vmatpush1.msra.mxu0 0.0
    %1190 = vmatprep.subr.mxu0 0.0
    %1191 = vmatpush1.msra.mxu0 0.0
    %1192 = vmatprep.subr.mxu0 0.0
    %1193 = vmatpush1.msra.mxu0 0.0
    %1194 = vmatprep.subr.mxu0 0.0
    %1195 = vmatpush1.msra.mxu0 0.0
    %1196 = vmatprep.subr.mxu0 0.0
    %1197 = vmatpush1.msra.mxu0 0.0
    %1198 = vmatprep.subr.mxu0 0.0
    %1199 = vmatpush1.msra.mxu0 0.0
    %1200 = vmatprep.subr.mxu0 0.0
    %1201 = vmatpush1.msra.mxu0 0.0
    %1202 = vmatprep.subr.mxu0 0.0
    %1203 = vmatpush1.msra.mxu0 0.0
    %1204 = vmatprep.subr.mxu0 0.0
    %1205 = vmatpush1.msra.mxu0 0.0
    %1206 = vmatprep.subr.mxu0 0.0
    %1207 = vmatpush1.msra.mxu0 0.0
    %1208 = vmatprep.subr.mxu0 0.0
    %1209 = vmatpush1.msra.mxu0 0.0
    %1210 = vmatprep.subr.mxu0 0.0
    %1211 = vmatpush1.msra.mxu0 0.0
    %1212 = vmatprep.subr.mxu0 0.0
    %1213 = vmatpush1.msra.mxu0 0.0
    %1214 = vmatprep.subr.mxu0 0.0
    %1215 = vmatpush1.msra.mxu0 0.0
    %1216 = vmatprep.subr.mxu0 0.0
    %1217 = vmatpush1.msra.mxu0 0.0
    %1218 = vmatprep.subr.mxu0 0.0
    %1219 = vmatpush1.msra.mxu0 0.0
    %1220 = vmatprep.subr.mxu0 0.0
    %1221 = vmatpush1.msra.mxu0 0.0
    %1222 = vmatprep.subr.mxu0 0.0
    %1223 = vmatpush1.msra.mxu0 0.0
    %1224 = vmatprep.subr.mxu0 0.0
    %1225 = vmatpush1.msra.mxu0 0.0
    %1226 = vmatprep.subr.mxu0 0.0
    %1227 = vmatpush1.msra.mxu0 0.0
    %1228 = vmatprep.subr.mxu0 0.0
    %1229 = vmatpush1.msra.mxu0 0.0
    %1230 = vmatprep.subr.mxu0 0.0
    %1231 = vmatpush1.msra.mxu0 0.0
    %1232 = vmatprep.subr.mxu0 0.0
    %1233 = vmatpush1.msra.mxu0 0.0
    %1234 = vmatprep.subr.mxu0 0.0
    %1235 = vmatpush1.msra.mxu0 0.0
    %1236 = vmatprep.subr.mxu0 0.0
    %1237 = vmatpush1.msra.mxu0 0.0
    %1238 = vmatprep.subr.mxu0 0.0
    %1239 = vmatpush1.msra.mxu0 0.0
    %1240 = vmatprep.subr.mxu0 0.0
    %1241 = vmatpush1.msra.mxu0 0.0
    %1242 = vmatprep.subr.mxu0 0.0
    %1243 = vmatpush1.msra.mxu0 0.0
    %1244 = vmatprep.mubr.f32.mxu0 0.0
    %1245 = vmatmul.mubr.f32.gmra.mrb[0].mxu0 %v1175
    %v1246 = vpop.f32.mrb[0].mxu0
    %v1247 = vadd.f32 %v1173, %v1246
    %v1248 = vpop.f32.mrb[0].mxu0
    %1249 = vmatprep.mubr.f32.mxu0 0.0
    %1250 = vmatmul.mubr.f32.gmra.mrb[0].mxu0 %v1178
    %v1251 = vpop.f32.mrb[0].mxu0
    %v1252 = vadd.f32 %v1173, %v1251
    %v1253 = vpop.f32.mrb[0].mxu0
    %1254 = vdwg.mxu0
    %1257 = vrot.lane.b32.xlu0 %v1247, 96
    %v1258 = vpop.permute.xlu0 %1257
    %1259 = vrot.lane.b32.xlu0 %v1252, 96
    %v1260 = vpop.permute.xlu0 %1259
    %v1261 = vsel %vm302, %v1247, 0
    %v1263 = vsel %vm302, %v1252, 0
    %v1265 = vsel %vm302, %v1258, 0
    %v1267 = vsel %vm302, %v1260, 0
    %1269 = vmatprep.subr.mxu0 0.0
    %1270 = vmatpush1.xpose.msra.mxu0 %v1265
    %1271 = vmatprep.subr.mxu0 0.0
    %1272 = vmatpush1.xpose.msra.mxu0 %v1267
    %1273 = vmatprep.subr.mxu0 0.0
    %1274 = vmatpush1.xpose.msra.mxu0 0.0
    %1275 = vmatprep.subr.mxu0 0.0
    %1276 = vmatpush1.xpose.msra.mxu0 0.0
    %1277 = vmatprep.subr.mxu0 0.0
    %1278 = vmatpush1.xpose.msra.mxu0 0.0
    %1279 = vmatprep.subr.mxu0 0.0
    %1280 = vmatpush1.xpose.msra.mxu0 0.0
    %1281 = vmatprep.subr.mxu0 0.0
    %1282 = vmatpush1.xpose.msra.mxu0 0.0
    %1283 = vmatprep.subr.mxu0 0.0
    %1284 = vmatpush1.xpose.msra.mxu0 0.0
    %1285 = vmatprep.subr.mxu0 0.0
    %1286 = vmatpush1.xpose.msra.mxu0 0.0
    %1287 = vmatprep.subr.mxu0 0.0
    %1288 = vmatpush1.xpose.msra.mxu0 0.0
    %1289 = vmatprep.subr.mxu0 0.0
    %1290 = vmatpush1.xpose.msra.mxu0 0.0
    %1291 = vmatprep.subr.mxu0 0.0
    %1292 = vmatpush1.xpose.msra.mxu0 0.0
    %1293 = vmatprep.subr.mxu0 0.0
    %1294 = vmatpush1.xpose.msra.mxu0 0.0
    %1295 = vmatprep.subr.mxu0 0.0
    %1296 = vmatpush1.xpose.msra.mxu0 0.0
    %1297 = vmatprep.subr.mxu0 0.0
    %1298 = vmatpush1.xpose.msra.mxu0 0.0
    %1299 = vmatprep.subr.mxu0 0.0
    %1300 = vmatpush1.xpose.msra.mxu0 0.0
    %1301 = vmatprep.subr.mxu0 0.0
    %1302 = vmatpush1.xpose.msra.mxu0 0.0
    %1303 = vmatprep.subr.mxu0 0.0
    %1304 = vmatpush1.xpose.msra.mxu0 0.0
    %1305 = vmatprep.subr.mxu0 0.0
    %1306 = vmatpush1.xpose.msra.mxu0 0.0
    %1307 = vmatprep.subr.mxu0 0.0
    %1308 = vmatpush1.xpose.msra.mxu0 0.0
    %1309 = vmatprep.subr.mxu0 0.0
    %1310 = vmatpush1.xpose.msra.mxu0 0.0
    %1311 = vmatprep.subr.mxu0 0.0
    %1312 = vmatpush1.xpose.msra.mxu0 0.0
    %1313 = vmatprep.subr.mxu0 0.0
    %1314 = vmatpush1.xpose.msra.mxu0 0.0
    %1315 = vmatprep.subr.mxu0 0.0
    %1316 = vmatpush1.xpose.msra.mxu0 0.0
    %1317 = vmatprep.subr.mxu0 0.0
    %1318 = vmatpush1.xpose.msra.mxu0 0.0
    %1319 = vmatprep.subr.mxu0 0.0
    %1320 = vmatpush1.xpose.msra.mxu0 0.0
    %1321 = vmatprep.subr.mxu0 0.0
    %1322 = vmatpush1.xpose.msra.mxu0 0.0
    %1323 = vmatprep.subr.mxu0 0.0
    %1324 = vmatpush1.xpose.msra.mxu0 0.0
    %1325 = vmatprep.subr.mxu0 0.0
    %1326 = vmatpush1.xpose.msra.mxu0 0.0
    %1327 = vmatprep.subr.mxu0 0.0
    %1328 = vmatpush1.xpose.msra.mxu0 0.0
    %1329 = vmatprep.subr.mxu0 0.0
    %1330 = vmatpush1.xpose.msra.mxu0 0.0
    %1331 = vmatprep.subr.mxu0 0.0
    %1332 = vmatpush1.xpose.msra.mxu0 0.0
    %1333 = vmatprep.mubr.f32.mxu0 0.0
    %1334 = vmatmul.mubr.f32.gmra.mrb[0].mxu0 %v1261
    %v1335 = vpop.f32.mrb[0].mxu0
    %v1336 = vadd.f32 0.0, %v1335
    %v1337 = vpop.f32.mrb[0].mxu0
    %1338 = vmatprep.mubr.f32.mxu0 0.0
    %1339 = vmatmul.mubr.f32.gmra.mrb[0].mxu0 %v1263
    %v1340 = vpop.f32.mrb[0].mxu0
    %v1341 = vadd.f32 0.0, %v1340
    %v1342 = vpop.f32.mrb[0].mxu0
    %1343 = vdwg.mxu0
    %v1344 = vmul.f32 %v1336, 0.25
    %v1345 = vmul.f32 %v1341, 0.25
    %v1346 = vadd.f32 %v1344, %v200
    %v1347 = vadd.f32 %v1345, %v201
    %v1348 = vsel %vm302, %v1346, -inf
    %1349 = vmax.xlane.f32.xlu0 %v1348
    %v1350 = vpop.xlane.xlu0 %1349
    %v1351 = vsel %vm302, %v1347, -inf
    %1352 = vmax.xlane.f32.xlu0 %v1351
    %v1353 = vpop.xlane.xlu0 %1352
    %v1354 = vsub.f32 %v1346, %v1350
    %v1355 = vsub.f32 %v1347, %v1353
    %v1356 = vmul.f32 %v1354, 1.442695
    %v1357 = vpow.pop %v1356
    %v1358 = vmul.f32 %v1355, 1.442695
    %v1359 = vpow.pop %v1358
    %v1360 = vsel %vm302, %v1357, 0.0
    %1361 = vadd.xlane.f32.xlu0 %v1360
    %v1362 = vpop.xlane.xlu0 %1361
    %v1363 = vsel %vm302, %v1359, 0.0
    %1364 = vadd.xlane.f32.xlu0 %v1363
    %v1365 = vpop.xlane.xlu0 %1364
    %v1366 = vrcp.pop %v1362
    %v1367 = vrcp.pop %v1365
    %v1368 = vmul.f32 %v1357, %v1366
    %v1369 = vmul.f32 %v1359, %v1367
    %1370 = vrot.lane.b32.xlu0 %v1247, 64
    %v1371 = vpop.permute.xlu0 %1370
    %1372 = vrot.lane.b32.xlu0 %v1252, 64
    %v1373 = vpop.permute.xlu0 %1372
    %v1377 = vsel %vm302, %v1368, 0
    %v1380 = vsel %vm302, %v1369, 0
    %1382 = vmatprep.subr.mxu0 0.0
    %1383 = vmatpush1.msra.mxu0 %v1371
    %1384 = vmatprep.subr.mxu0 0.0
    %1385 = vmatpush1.msra.mxu0 %v1373
    %1386 = vmatprep.subr.mxu0 0.0
    %1387 = vmatpush1.msra.mxu0 0.0
    %1388 = vmatprep.subr.mxu0 0.0
    %1389 = vmatpush1.msra.mxu0 0.0
    %1390 = vmatprep.subr.mxu0 0.0
    %1391 = vmatpush1.msra.mxu0 0.0
    %1392 = vmatprep.subr.mxu0 0.0
    %1393 = vmatpush1.msra.mxu0 0.0
    %1394 = vmatprep.subr.mxu0 0.0
    %1395 = vmatpush1.msra.mxu0 0.0
    %1396 = vmatprep.subr.mxu0 0.0
    %1397 = vmatpush1.msra.mxu0 0.0
    %1398 = vmatprep.subr.mxu0 0.0
    %1399 = vmatpush1.msra.mxu0 0.0
    %1400 = vmatprep.subr.mxu0 0.0
    %1401 = vmatpush1.msra.mxu0 0.0
    %1402 = vmatprep.subr.mxu0 0.0
    %1403 = vmatpush1.msra.mxu0 0.0
    %1404 = vmatprep.subr.mxu0 0.0
    %1405 = vmatpush1.msra.mxu0 0.0
    %1406 = vmatprep.subr.mxu0 0.0
    %1407 = vmatpush1.msra.mxu0 0.0
    %1408 = vmatprep.subr.mxu0 0.0
    %1409 = vmatpush1.msra.mxu0 0.0
    %1410 = vmatprep.subr.mxu0 0.0
    %1411 = vmatpush1.msra.mxu0 0.0
    %1412 = vmatprep.subr.mxu0 0.0
    %1413 = vmatpush1.msra.mxu0 0.0
    %1414 = vmatprep.subr.mxu0 0.0
    %1415 = vmatpush1.msra.mxu0 0.0
    %1416 = vmatprep.subr.mxu0 0.0
    %1417 = vmatpush1.msra.mxu0 0.0
    %1418 = vmatprep.subr.mxu0 0.0
    %1419 = vmatpush1.msra.mxu0 0.0
    %1420 = vmatprep.subr.mxu0 0.0
    %1421 = vmatpush1.msra.mxu0 0.0
    %1422 = vmatprep.subr.mxu0 0.0
    %1423 = vmatpush1.msra.mxu0 0.0
    %1424 = vmatprep.subr.mxu0 0.0
    %1425 = vmatpush1.msra.mxu0 0.0
    %1426 = vmatprep.subr.mxu0 0.0
    %1427 = vmatpush1.msra.mxu0 0.0
    %1428 = vmatprep.subr.mxu0 0.0
    %1429 = vmatpush1.msra.mxu0 0.0
    %1430 = vmatprep.subr.mxu0 0.0
    %1431 = vmatpush1.msra.mxu0 0.0
    %1432 = vmatprep.subr.mxu0 0.0
    %1433 = vmatpush1.msra.mxu0 0.0
    %1434 = vmatprep.subr.mxu0 0.0
    %1435 = vmatpush1.msra.mxu0 0.0
    %1436 = vmatprep.subr.mxu0 0.0
    %1437 = vmatpush1.msra.mxu0 0.0
    %1438 = vmatprep.subr.mxu0 0.0
    %1439 = vmatpush1.msra.mxu0 0.0
    %1440 = vmatprep.subr.mxu0 0.0
    %1441 = vmatpush1.msra.mxu0 0.0
    %1442 = vmatprep.subr.mxu0 0.0
    %1443 = vmatpush1.msra.mxu0 0.0
    %1444 = vmatprep.subr.mxu0 0.0
    %1445 = vmatpush1.msra.mxu0 0.0
    %1446 = vmatprep.mubr.f32.mxu0 0.0
    %1447 = vmatmul.mubr.f32.gmra.mrb[0].mxu0 %v1377
    %v1448 = vpop.f32.mrb[0].mxu0
    %v1449 = vadd.f32 0.0, %v1448
    %v1450 = vpop.f32.mrb[0].mxu0
    %1451 = vmatprep.mubr.f32.mxu0 0.0
    %1452 = vmatmul.mubr.f32.gmra.mrb[0].mxu0 %v1380
    %v1453 = vpop.f32.mrb[0].mxu0
    %v1454 = vadd.f32 0.0, %v1453
    %v1455 = vpop.f32.mrb[0].mxu0
    %1456 = vdwg.mxu0
    %1457 = vrot.lane.b32.xlu0 %v1247, 112
    %v1458 = vpop.permute.xlu0 %1457
    %1459 = vrot.lane.b32.xlu0 %v1252, 112
    %v1460 = vpop.permute.xlu0 %1459
    %1461 = vrot.lane.b32.xlu0 %v1247, 80
    %v1462 = vpop.permute.xlu0 %1461
    %1463 = vrot.lane.b32.xlu0 %v1252, 80
    %v1464 = vpop.permute.xlu0 %1463
    %v1465 = vsel %vm302, %v1458, 0
    %v1467 = vsel %vm302, %v1460, 0
    %v1469 = vsel %vm302, %v1462, 0
    %v1471 = vsel %vm302, %v1464, 0
    %1473 = vmatprep.subr.mxu0 0.0
    %1474 = vmatpush1.xpose.msra.mxu0 %v1469
    %1475 = vmatprep.subr.mxu0 0.0
    %1476 = vmatpush1.xpose.msra.mxu0 %v1471
    %1477 = vmatprep.subr.mxu0 0.0
    %1478 = vmatpush1.xpose.msra.mxu0 0.0
    %1479 = vmatprep.subr.mxu0 0.0
    %1480 = vmatpush1.xpose.msra.mxu0 0.0
    %1481 = vmatprep.subr.mxu0 0.0
    %1482 = vmatpush1.xpose.msra.mxu0 0.0
    %1483 = vmatprep.subr.mxu0 0.0
    %1484 = vmatpush1.xpose.msra.mxu0 0.0
    %1485 = vmatprep.subr.mxu0 0.0
    %1486 = vmatpush1.xpose.msra.mxu0 0.0
    %1487 = vmatprep.subr.mxu0 0.0
    %1488 = vmatpush1.xpose.msra.mxu0 0.0
    %1489 = vmatprep.subr.mxu0 0.0
    %1490 = vmatpush1.xpose.msra.mxu0 0.0
    %1491 = vmatprep.subr.mxu0 0.0
    %1492 = vmatpush1.xpose.msra.mxu0 0.0
    %1493 = vmatprep.subr.mxu0 0.0
    %1494 = vmatpush1.xpose.msra.mxu0 0.0
    %1495 = vmatprep.subr.mxu0 0.0
    %1496 = vmatpush1.xpose.msra.mxu0 0.0
    %1497 = vmatprep.subr.mxu0 0.0
    %1498 = vmatpush1.xpose.msra.mxu0 0.0
    %1499 = vmatprep.subr.mxu0 0.0
    %1500 = vmatpush1.xpose.msra.mxu0 0.0
    %1501 = vmatprep.subr.mxu0 0.0
    %1502 = vmatpush1.xpose.msra.mxu0 0.0
    %1503 = vmatprep.subr.mxu0 0.0
    %1504 = vmatpush1.xpose.msra.mxu0 0.0
    %1505 = vmatprep.subr.mxu0 0.0
    %1506 = vmatpush1.xpose.msra.mxu0 0.0
    %1507 = vmatprep.subr.mxu0 0.0
    %1508 = vmatpush1.xpose.msra.mxu0 0.0
    %1509 = vmatprep.subr.mxu0 0.0
    %1510 = vmatpush1.xpose.msra.mxu0 0.0
    %1511 = vmatprep.subr.mxu0 0.0
    %1512 = vmatpush1.xpose.msra.mxu0 0.0
    %1513 = vmatprep.subr.mxu0 0.0
    %1514 = vmatpush1.xpose.msra.mxu0 0.0
    %1515 = vmatprep.subr.mxu0 0.0
    %1516 = vmatpush1.xpose.msra.mxu0 0.0
    %1517 = vmatprep.subr.mxu0 0.0
    %1518 = vmatpush1.xpose.msra.mxu0 0.0
    %1519 = vmatprep.subr.mxu0 0.0
    %1520 = vmatpush1.xpose.msra.mxu0 0.0
    %1521 = vmatprep.subr.mxu0 0.0
    %1522 = vmatpush1.xpose.msra.mxu0 0.0
    %1523 = vmatprep.subr.mxu0 0.0
    %1524 = vmatpush1.xpose.msra.mxu0 0.0
    %1525 = vmatprep.subr.mxu0 0.0
    %1526 = vmatpush1.xpose.msra.mxu0 0.0
    %1527 = vmatprep.subr.mxu0 0.0
    %1528 = vmatpush1.xpose.msra.mxu0 0.0
    %1529 = vmatprep.subr.mxu0 0.0
    %1530 = vmatpush1.xpose.msra.mxu0 0.0
    %1531 = vmatprep.subr.mxu0 0.0
    %1532 = vmatpush1.xpose.msra.mxu0 0.0
    %1533 = vmatprep.subr.mxu0 0.0
    %1534 = vmatpush1.xpose.msra.mxu0 0.0
    %1535 = vmatprep.subr.mxu0 0.0
    %1536 = vmatpush1.xpose.msra.mxu0 0.0
    %1537 = vmatprep.mubr.f32.mxu0 0.0
    %1538 = vmatmul.mubr.f32.gmra.mrb[0].mxu0 %v1465
    %v1539 = vpop.f32.mrb[0].mxu0
    %v1540 = vadd.f32 0.0, %v1539
    %v1541 = vpop.f32.mrb[0].mxu0
    %1542 = vmatprep.mubr.f32.mxu0 0.0
    %1543 = vmatmul.mubr.f32.gmra.mrb[0].mxu0 %v1467
    %v1544 = vpop.f32.mrb[0].mxu0
    %v1545 = vadd.f32 0.0, %v1544
    %v1546 = vpop.f32.mrb[0].mxu0
    %1547 = vdwg.mxu0
    %v1548 = vmul.f32 %v1540, 0.25
    %v1549 = vmul.f32 %v1545, 0.25
    %v1550 = vadd.f32 %v1548, %v200
    %v1551 = vadd.f32 %v1549, %v201
    %v1552 = vsel %vm302, %v1550, -inf
    %1553 = vmax.xlane.f32.xlu0 %v1552
    %v1554 = vpop.xlane.xlu0 %1553
    %v1555 = vsel %vm302, %v1551, -inf
    %1556 = vmax.xlane.f32.xlu0 %v1555
    %v1557 = vpop.xlane.xlu0 %1556
    %v1558 = vsub.f32 %v1550, %v1554
    %v1559 = vsub.f32 %v1551, %v1557
    %v1560 = vmul.f32 %v1558, 1.442695
    %v1561 = vpow.pop %v1560
    %v1562 = vmul.f32 %v1559, 1.442695
    %v1563 = vpow.pop %v1562
    %v1564 = vsel %vm302, %v1561, 0.0
    %1565 = vadd.xlane.f32.xlu0 %v1564
    %v1566 = vpop.xlane.xlu0 %1565
    %v1567 = vsel %vm302, %v1563, 0.0
    %1568 = vadd.xlane.f32.xlu0 %v1567
    %v1569 = vpop.xlane.xlu0 %1568
    %v1570 = vrcp.pop %v1566
    %v1571 = vrcp.pop %v1569
    %v1572 = vmul.f32 %v1561, %v1570
    %v1573 = vmul.f32 %v1563, %v1571
    %1574 = vrot.lane.b32.xlu0 %v1247, 48
    %v1575 = vpop.permute.xlu0 %1574
    %1576 = vrot.lane.b32.xlu0 %v1252, 48
    %v1577 = vpop.permute.xlu0 %1576
    %v1581 = vsel %vm302, %v1572, 0
    %v1584 = vsel %vm302, %v1573, 0
    %1586 = vmatprep.subr.mxu0 0.0
    %1587 = vmatpush1.msra.mxu0 %v1575
    %1588 = vmatprep.subr.mxu0 0.0
    %1589 = vmatpush1.msra.mxu0 %v1577
    %1590 = vmatprep.subr.mxu0 0.0
    %1591 = vmatpush1.msra.mxu0 0.0
    %1592 = vmatprep.subr.mxu0 0.0
    %1593 = vmatpush1.msra.mxu0 0.0
    %1594 = vmatprep.subr.mxu0 0.0
    %1595 = vmatpush1.msra.mxu0 0.0
    %1596 = vmatprep.subr.mxu0 0.0
    %1597 = vmatpush1.msra.mxu0 0.0
    %1598 = vmatprep.subr.mxu0 0.0
    %1599 = vmatpush1.msra.mxu0 0.0
    %1600 = vmatprep.subr.mxu0 0.0
    %1601 = vmatpush1.msra.mxu0 0.0
    %1602 = vmatprep.subr.mxu0 0.0
    %1603 = vmatpush1.msra.mxu0 0.0
    %1604 = vmatprep.subr.mxu0 0.0
    %1605 = vmatpush1.msra.mxu0 0.0
    %1606 = vmatprep.subr.mxu0 0.0
    %1607 = vmatpush1.msra.mxu0 0.0
    %1608 = vmatprep.subr.mxu0 0.0
    %1609 = vmatpush1.msra.mxu0 0.0
    %1610 = vmatprep.subr.mxu0 0.0
    %1611 = vmatpush1.msra.mxu0 0.0
    %1612 = vmatprep.subr.mxu0 0.0
    %1613 = vmatpush1.msra.mxu0 0.0
    %1614 = vmatprep.subr.mxu0 0.0
    %1615 = vmatpush1.msra.mxu0 0.0
    %1616 = vmatprep.subr.mxu0 0.0
    %1617 = vmatpush1.msra.mxu0 0.0
    %1618 = vmatprep.subr.mxu0 0.0
    %1619 = vmatpush1.msra.mxu0 0.0
    %1620 = vmatprep.subr.mxu0 0.0
    %1621 = vmatpush1.msra.mxu0 0.0
    %1622 = vmatprep.subr.mxu0 0.0
    %1623 = vmatpush1.msra.mxu0 0.0
    %1624 = vmatprep.subr.mxu0 0.0
    %1625 = vmatpush1.msra.mxu0 0.0
    %1626 = vmatprep.subr.mxu0 0.0
    %1627 = vmatpush1.msra.mxu0 0.0
    %1628 = vmatprep.subr.mxu0 0.0
    %1629 = vmatpush1.msra.mxu0 0.0
    %1630 = vmatprep.subr.mxu0 0.0
    %1631 = vmatpush1.msra.mxu0 0.0
    %1632 = vmatprep.subr.mxu0 0.0
    %1633 = vmatpush1.msra.mxu0 0.0
    %1634 = vmatprep.subr.mxu0 0.0
    %1635 = vmatpush1.msra.mxu0 0.0
    %1636 = vmatprep.subr.mxu0 0.0
    %1637 = vmatpush1.msra.mxu0 0.0
    %1638 = vmatprep.subr.mxu0 0.0
    %1639 = vmatpush1.msra.mxu0 0.0
    %1640 = vmatprep.subr.mxu0 0.0
    %1641 = vmatpush1.msra.mxu0 0.0
    %1642 = vmatprep.subr.mxu0 0.0
    %1643 = vmatpush1.msra.mxu0 0.0
    %1644 = vmatprep.subr.mxu0 0.0
    %1645 = vmatpush1.msra.mxu0 0.0
    %1646 = vmatprep.subr.mxu0 0.0
    %1647 = vmatpush1.msra.mxu0 0.0
    %1648 = vmatprep.subr.mxu0 0.0
    %1649 = vmatpush1.msra.mxu0 0.0
    %1650 = vmatprep.mubr.f32.mxu0 0.0
    %1651 = vmatmul.mubr.f32.gmra.mrb[0].mxu0 %v1581
    %v1652 = vpop.f32.mrb[0].mxu0
    %v1653 = vadd.f32 0.0, %v1652
    %v1654 = vpop.f32.mrb[0].mxu0
    %1655 = vmatprep.mubr.f32.mxu0 0.0
    %1656 = vmatmul.mubr.f32.gmra.mrb[0].mxu0 %v1584
    %v1657 = vpop.f32.mrb[0].mxu0
    %v1658 = vadd.f32 0.0, %v1657
    %v1659 = vpop.f32.mrb[0].mxu0
    %1660 = vdwg.mxu0
    %v1662 = vsel %vm302, %v1653, 0
    %v1665 = vsel %vm302, %v1658, 0
    %1667 = vmatprep.subr.mxu0 0.0
    %1668 = vmatpush1.msra.mxu0 %v1167
    %1669 = vmatprep.subr.mxu0 0.0
    %1670 = vmatpush1.msra.mxu0 %v1168
    %1671 = vmatprep.subr.mxu0 0.0
    %1672 = vmatpush1.msra.mxu0 0.0
    %1673 = vmatprep.subr.mxu0 0.0
    %1674 = vmatpush1.msra.mxu0 0.0
    %1675 = vmatprep.subr.mxu0 0.0
    %1676 = vmatpush1.msra.mxu0 0.0
    %1677 = vmatprep.subr.mxu0 0.0
    %1678 = vmatpush1.msra.mxu0 0.0
    %1679 = vmatprep.subr.mxu0 0.0
    %1680 = vmatpush1.msra.mxu0 0.0
    %1681 = vmatprep.subr.mxu0 0.0
    %1682 = vmatpush1.msra.mxu0 0.0
    %1683 = vmatprep.subr.mxu0 0.0
    %1684 = vmatpush1.msra.mxu0 0.0
    %1685 = vmatprep.subr.mxu0 0.0
    %1686 = vmatpush1.msra.mxu0 0.0
    %1687 = vmatprep.subr.mxu0 0.0
    %1688 = vmatpush1.msra.mxu0 0.0
    %1689 = vmatprep.subr.mxu0 0.0
    %1690 = vmatpush1.msra.mxu0 0.0
    %1691 = vmatprep.subr.mxu0 0.0
    %1692 = vmatpush1.msra.mxu0 0.0
    %1693 = vmatprep.subr.mxu0 0.0
    %1694 = vmatpush1.msra.mxu0 0.0
    %1695 = vmatprep.subr.mxu0 0.0
    %1696 = vmatpush1.msra.mxu0 0.0
    %1697 = vmatprep.subr.mxu0 0.0
    %1698 = vmatpush1.msra.mxu0 0.0
    %1699 = vmatprep.subr.mxu0 0.0
    %1700 = vmatpush1.msra.mxu0 0.0
    %1701 = vmatprep.subr.mxu0 0.0
    %1702 = vmatpush1.msra.mxu0 0.0
    %1703 = vmatprep.subr.mxu0 0.0
    %1704 = vmatpush1.msra.mxu0 0.0
    %1705 = vmatprep.subr.mxu0 0.0
    %1706 = vmatpush1.msra.mxu0 0.0
    %1707 = vmatprep.subr.mxu0 0.0
    %1708 = vmatpush1.msra.mxu0 0.0
    %1709 = vmatprep.subr.mxu0 0.0
    %1710 = vmatpush1.msra.mxu0 0.0
    %1711 = vmatprep.subr.mxu0 0.0
    %1712 = vmatpush1.msra.mxu0 0.0
    %1713 = vmatprep.subr.mxu0 0.0
    %1714 = vmatpush1.msra.mxu0 0.0
    %1715 = vmatprep.subr.mxu0 0.0
    %1716 = vmatpush1.msra.mxu0 0.0
    %1717 = vmatprep.subr.mxu0 0.0
    %1718 = vmatpush1.msra.mxu0 0.0
    %1719 = vmatprep.subr.mxu0 0.0
    %1720 = vmatpush1.msra.mxu0 0.0
    %1721 = vmatprep.subr.mxu0 0.0
    %1722 = vmatpush1.msra.mxu0 0.0
    %1723 = vmatprep.subr.mxu0 0.0
    %1724 = vmatpush1.msra.mxu0 0.0
    %1725 = vmatprep.subr.mxu0 0.0
    %1726 = vmatpush1.msra.mxu0 0.0
    %1727 = vmatprep.subr.mxu0 0.0
    %1728 = vmatpush1.msra.mxu0 0.0
    %1729 = vmatprep.subr.mxu0 0.0
    %1730 = vmatpush1.msra.mxu0 0.0
    %1731 = vmatprep.mubr.f32.mxu0 0.0
    %1732 = vmatmul.mubr.f32.gmra.mrb[0].mxu0 %v1662
    %v1733 = vpop.f32.mrb[0].mxu0
    %v1734 = vadd.f32 0.0, %v1733
    %v1735 = vpop.f32.mrb[0].mxu0
    %1736 = vmatprep.mubr.f32.mxu0 0.0
    %1737 = vmatmul.mubr.f32.gmra.mrb[0].mxu0 %v1665
    %v1738 = vpop.f32.mrb[0].mxu0
    %v1739 = vadd.f32 0.0, %v1738
    %v1740 = vpop.f32.mrb[0].mxu0
    %1741 = vdwg.mxu0
    %v1743 = vsel %vm302, %v1449, 0
    %v1746 = vsel %vm302, %v1454, 0
    %1748 = vmatprep.subr.mxu0 0.0
    %1749 = vmatpush1.msra.mxu0 %v1165
    %1750 = vmatprep.subr.mxu0 0.0
    %1751 = vmatpush1.msra.mxu0 %v1166
    %1752 = vmatprep.subr.mxu0 0.0
    %1753 = vmatpush1.msra.mxu0 0.0
    %1754 = vmatprep.subr.mxu0 0.0
    %1755 = vmatpush1.msra.mxu0 0.0
    %1756 = vmatprep.subr.mxu0 0.0
    %1757 = vmatpush1.msra.mxu0 0.0
    %1758 = vmatprep.subr.mxu0 0.0
    %1759 = vmatpush1.msra.mxu0 0.0
    %1760 = vmatprep.subr.mxu0 0.0
    %1761 = vmatpush1.msra.mxu0 0.0
    %1762 = vmatprep.subr.mxu0 0.0
    %1763 = vmatpush1.msra.mxu0 0.0
    %1764 = vmatprep.subr.mxu0 0.0
    %1765 = vmatpush1.msra.mxu0 0.0
    %1766 = vmatprep.subr.mxu0 0.0
    %1767 = vmatpush1.msra.mxu0 0.0
    %1768 = vmatprep.subr.mxu0 0.0
    %1769 = vmatpush1.msra.mxu0 0.0
    %1770 = vmatprep.subr.mxu0 0.0
    %1771 = vmatpush1.msra.mxu0 0.0
    %1772 = vmatprep.subr.mxu0 0.0
    %1773 = vmatpush1.msra.mxu0 0.0
    %1774 = vmatprep.subr.mxu0 0.0
    %1775 = vmatpush1.msra.mxu0 0.0
    %1776 = vmatprep.subr.mxu0 0.0
    %1777 = vmatpush1.msra.mxu0 0.0
    %1778 = vmatprep.subr.mxu0 0.0
    %1779 = vmatpush1.msra.mxu0 0.0
    %1780 = vmatprep.subr.mxu0 0.0
    %1781 = vmatpush1.msra.mxu0 0.0
    %1782 = vmatprep.subr.mxu0 0.0
    %1783 = vmatpush1.msra.mxu0 0.0
    %1784 = vmatprep.subr.mxu0 0.0
    %1785 = vmatpush1.msra.mxu0 0.0
    %1786 = vmatprep.subr.mxu0 0.0
    %1787 = vmatpush1.msra.mxu0 0.0
    %1788 = vmatprep.subr.mxu0 0.0
    %1789 = vmatpush1.msra.mxu0 0.0
    %1790 = vmatprep.subr.mxu0 0.0
    %1791 = vmatpush1.msra.mxu0 0.0
    %1792 = vmatprep.subr.mxu0 0.0
    %1793 = vmatpush1.msra.mxu0 0.0
    %1794 = vmatprep.subr.mxu0 0.0
    %1795 = vmatpush1.msra.mxu0 0.0
    %1796 = vmatprep.subr.mxu0 0.0
    %1797 = vmatpush1.msra.mxu0 0.0
    %1798 = vmatprep.subr.mxu0 0.0
    %1799 = vmatpush1.msra.mxu0 0.0
    %1800 = vmatprep.subr.mxu0 0.0
    %1801 = vmatpush1.msra.mxu0 0.0
    %1802 = vmatprep.subr.mxu0 0.0
    %1803 = vmatpush1.msra.mxu0 0.0
    %1804 = vmatprep.subr.mxu0 0.0
    %1805 = vmatpush1.msra.mxu0 0.0
    %1806 = vmatprep.subr.mxu0 0.0
    %1807 = vmatpush1.msra.mxu0 0.0
    %1808 = vmatprep.subr.mxu0 0.0
    %1809 = vmatpush1.msra.mxu0 0.0
    %1810 = vmatprep.subr.mxu0 0.0
    %1811 = vmatpush1.msra.mxu0 0.0
    %1812 = vmatprep.mubr.f32.mxu0 0.0
    %1813 = vmatmul.mubr.f32.gmra.mrb[0].mxu0 %v1743
    %v1814 = vpop.f32.mrb[0].mxu0
    %v1815 = vadd.f32 %v1734, %v1814
    %v1816 = vpop.f32.mrb[0].mxu0
    %1817 = vmatprep.mubr.f32.mxu0 0.0
    %1818 = vmatmul.mubr.f32.gmra.mrb[0].mxu0 %v1746
    %v1819 = vpop.f32.mrb[0].mxu0
    %v1820 = vadd.f32 %v1739, %v1819
    %v1821 = vpop.f32.mrb[0].mxu0
    %1822 = vdwg.mxu0
    %v1823 = vld [vmem:[%s9 + $0xc] sm:$0x1]
    %v1824 = vlaneseq
    %v1825 = vshrl.u32 %v1824, 7
    %v1826 = vsub.s32 0, %v1825
    %v1827 = vrot.slane %v1823, %v1826
    %v1828 = vadd.f32 %v1815, %v1827
    %v1829 = vadd.f32 %v1820, %v1827
    %v1830 = vadd.f32 %v1157, %v1828
    %v1831 = vadd.f32 %v1158, %v1829
    %v1832 = vld [vmem:[%s9 + $0xf] sm:$0x1]
    %v1833 = vld [vmem:[%s9 + $0x10] sm:$0x1]
    %v1834 = vsel %vm148, %v1830, 0.0
    %1835 = vadd.xlane.f32.xlu0 %v1834
    %v1836 = vpop.xlane.xlu0 %1835
    %v1837 = vsel %vm148, %v1831, 0.0
    %1838 = vadd.xlane.f32.xlu0 %v1837
    %v1839 = vpop.xlane.xlu0 %1838
    %v1840 = vmul.f32 %v1836, %v155
    %v1841 = vmul.f32 %v1839, %v155
    %v1842 = vsub.f32 %v1830, %v1840
    %v1843 = vsub.f32 %v1831, %v1841
    %v1844 = vmul.f32 %v1842, %v1842
    %v1845 = vmul.f32 %v1843, %v1843
    %v1846 = vsel %vm148, %v1844, 0.0
    %1847 = vadd.xlane.f32.xlu0 %v1846
    %v1848 = vpop.xlane.xlu0 %1847
    %v1849 = vsel %vm148, %v1845, 0.0
    %1850 = vadd.xlane.f32.xlu0 %v1849
    %v1851 = vpop.xlane.xlu0 %1850
    %v1852 = vmul.f32 %v1848, %v155
    %v1853 = vmul.f32 %v1851, %v155
    %v1854 = vadd.f32 %v1852, 1e-12
    %v1855 = vadd.f32 %v1853, 1e-12
    %v1856 = vrsqrt.pop %v1854
    %v1857 = vrsqrt.pop %v1855
    %v1858 = vmul.f32 %v1842, %v1856
    %v1859 = vmul.f32 %v1843, %v1857
    %v1860 = vlaneseq
    %v1861 = vshrl.u32 %v1860, 7
    %v1862 = vsub.s32 0, %v1861
    %v1863 = vrot.slane %v1832, %v1862
    %v1864 = vmul.f32 %v1858, %v1863
    %v1865 = vmul.f32 %v1859, %v1863
    %v1866 = vlaneseq
    %v1867 = vshrl.u32 %v1866, 7
    %v1868 = vsub.s32 0, %v1867
    %v1869 = vrot.slane %v1833, %v1868
    %v1870 = vadd.f32 %v1864, %v1869
    %v1871 = vadd.f32 %v1865, %v1869
    %s1872 = scalar_lea.vmem %s6, 32
    %v1873 = vld [vmem:[%s1872] sm:$0xff]
    %v1874 = vld [vmem:[%s1872 + $0x8] sm:$0xff]
    %v1875 = vld [vmem:[%s1872 + $0x10] sm:$0xff]
    %v1876 = vld [vmem:[%s1872 + $0x18] sm:$0xff]
    %v1877 = vld [vmem:[%s9 + $0xd] sm:$0x1]
    %v1878 = vlaneseq
    %v1879 = vshrl.u32 %v1878, 7
    %v1880 = vsub.s32 0, %v1879
    %v1881 = vrot.slane %v1877, %v1880
    %v1883 = vsel %vm148, %v1870, 0
    %v1886 = vsel %vm148, %v1871, 0
    %1888 = vmatprep.subr.mxu0 0.0
    %1889 = vmatpush1.msra.mxu0 %v1873
    %1890 = vmatprep.subr.mxu0 0.0
    %1891 = vmatpush1.msra.mxu0 %v1874
    %1892 = vmatprep.subr.mxu0 0.0
    %1893 = vmatpush1.msra.mxu0 %v1875
    %1894 = vmatprep.subr.mxu0 0.0
    %1895 = vmatpush1.msra.mxu0 %v1876
    %1896 = vmatprep.subr.mxu0 0.0
    %1897 = vmatpush1.msra.mxu0 0.0
    %1898 = vmatprep.subr.mxu0 0.0
    %1899 = vmatpush1.msra.mxu0 0.0
    %1900 = vmatprep.subr.mxu0 0.0
    %1901 = vmatpush1.msra.mxu0 0.0
    %1902 = vmatprep.subr.mxu0 0.0
    %1903 = vmatpush1.msra.mxu0 0.0
    %1904 = vmatprep.subr.mxu0 0.0
    %1905 = vmatpush1.msra.mxu0 0.0
    %1906 = vmatprep.subr.mxu0 0.0
    %1907 = vmatpush1.msra.mxu0 0.0
    %1908 = vmatprep.subr.mxu0 0.0
    %1909 = vmatpush1.msra.mxu0 0.0
    %1910 = vmatprep.subr.mxu0 0.0
    %1911 = vmatpush1.msra.mxu0 0.0
    %1912 = vmatprep.subr.mxu0 0.0
    %1913 = vmatpush1.msra.mxu0 0.0
    %1914 = vmatprep.subr.mxu0 0.0
    %1915 = vmatpush1.msra.mxu0 0.0
    %1916 = vmatprep.subr.mxu0 0.0
    %1917 = vmatpush1.msra.mxu0 0.0
    %1918 = vmatprep.subr.mxu0 0.0
    %1919 = vmatpush1.msra.mxu0 0.0
    %1920 = vmatprep.subr.mxu0 0.0
    %1921 = vmatpush1.msra.mxu0 0.0
    %1922 = vmatprep.subr.mxu0 0.0
    %1923 = vmatpush1.msra.mxu0 0.0
    %1924 = vmatprep.subr.mxu0 0.0
    %1925 = vmatpush1.msra.mxu0 0.0
    %1926 = vmatprep.subr.mxu0 0.0
    %1927 = vmatpush1.msra.mxu0 0.0
    %1928 = vmatprep.subr.mxu0 0.0
    %1929 = vmatpush1.msra.mxu0 0.0
    %1930 = vmatprep.subr.mxu0 0.0
    %1931 = vmatpush1.msra.mxu0 0.0
    %1932 = vmatprep.subr.mxu0 0.0
    %1933 = vmatpush1.msra.mxu0 0.0
    %1934 = vmatprep.subr.mxu0 0.0
    %1935 = vmatpush1.msra.mxu0 0.0
    %1936 = vmatprep.subr.mxu0 0.0
    %1937 = vmatpush1.msra.mxu0 0.0
    %1938 = vmatprep.subr.mxu0 0.0
    %1939 = vmatpush1.msra.mxu0 0.0
    %1940 = vmatprep.subr.mxu0 0.0
    %1941 = vmatpush1.msra.mxu0 0.0
    %1942 = vmatprep.subr.mxu0 0.0
    %1943 = vmatpush1.msra.mxu0 0.0
    %1944 = vmatprep.subr.mxu0 0.0
    %1945 = vmatpush1.msra.mxu0 0.0
    %1946 = vmatprep.subr.mxu0 0.0
    %1947 = vmatpush1.msra.mxu0 0.0
    %1948 = vmatprep.subr.mxu0 0.0
    %1949 = vmatpush1.msra.mxu0 0.0
    %1950 = vmatprep.subr.mxu0 0.0
    %1951 = vmatpush1.msra.mxu0 0.0
    %1952 = vmatprep.mubr.f32.mxu0 0.0
    %1953 = vmatmul.mubr.f32.gmra.mrb[0].mxu0 %v1883
    %v1954 = vpop.f32.mrb[0].mxu0
    %v1955 = vadd.f32 %v1881, %v1954
    %v1956 = vpop.f32.mrb[0].mxu0
    %1957 = vmatprep.mubr.f32.mxu0 0.0
    %1958 = vmatmul.mubr.f32.gmra.mrb[0].mxu0 %v1886
    %v1959 = vpop.f32.mrb[0].mxu0
    %v1960 = vadd.f32 %v1881, %v1959
    %v1961 = vpop.f32.mrb[0].mxu0
    %1962 = vdwg.mxu0
    %v1963 = vmul.f32 %v1955, %v1955
    %v1964 = vmul.f32 %v1960, %v1960
    %v1965 = vmul.f32 %v1955, %v1963
    %v1966 = vmul.f32 %v1960, %v1964
    %v1967 = vmul.f32 %v1965, 0.044715
    %v1968 = vmul.f32 %v1966, 0.044715
    %v1969 = vadd.f32 %v1955, %v1967
    %v1970 = vadd.f32 %v1960, %v1968
    %v1971 = vmul.f32 %v1969, 0.7978846
    %v1972 = vmul.f32 %v1970, 0.7978846
    %v1973 = vtanh.pop %v1971
    %v1974 = vtanh.pop %v1972
    %v1975 = vadd.f32 %v1973, 1.0
    %v1976 = vadd.f32 %v1974, 1.0
    %v1977 = vmul.f32 %v1975, 0.5
    %v1978 = vmul.f32 %v1976, 0.5
    %v1979 = vmul.f32 %v1955, %v1977
    %v1980 = vmul.f32 %v1960, %v1978
    %s1981 = scalar_lea.vmem %s7, 64
    %v1982 = vld [vmem:[%s1981] sm:$0xff]
    %v1983 = vld [vmem:[%s1981 + $0x8] sm:$0xff]
    %v1984 = vld [vmem:[%s1981 + $0x10] sm:$0xff]
    %v1985 = vld [vmem:[%s1981 + $0x18] sm:$0xff]
    %v1986 = vld [vmem:[%s1981 + $0x20] sm:$0xff]
    %v1987 = vld [vmem:[%s1981 + $0x28] sm:$0xff]
    %v1988 = vld [vmem:[%s1981 + $0x30] sm:$0xff]
    %v1989 = vld [vmem:[%s1981 + $0x38] sm:$0xff]
    %v1990 = vld [vmem:[%s9 + $0xe] sm:$0x1]
    %v1991 = vlaneseq
    %v1992 = vshrl.u32 %v1991, 7
    %v1993 = vsub.s32 0, %v1992
    %v1994 = vrot.slane %v1990, %v1993
    %v1996 = vsel %vm1035, %v1979, 0
    %v1999 = vsel %vm1035, %v1980, 0
    %2001 = vmatprep.subr.mxu0 0.0
    %2002 = vmatpush1.msra.mxu0 %v1982
    %2003 = vmatprep.subr.mxu0 0.0
    %2004 = vmatpush1.msra.mxu0 %v1983
    %2005 = vmatprep.subr.mxu0 0.0
    %2006 = vmatpush1.msra.mxu0 %v1984
    %2007 = vmatprep.subr.mxu0 0.0
    %2008 = vmatpush1.msra.mxu0 %v1985
    %2009 = vmatprep.subr.mxu0 0.0
    %2010 = vmatpush1.msra.mxu0 %v1986
    %2011 = vmatprep.subr.mxu0 0.0
    %2012 = vmatpush1.msra.mxu0 %v1987
    %2013 = vmatprep.subr.mxu0 0.0
    %2014 = vmatpush1.msra.mxu0 %v1988
    %2015 = vmatprep.subr.mxu0 0.0
    %2016 = vmatpush1.msra.mxu0 %v1989
    %2017 = vmatprep.subr.mxu0 0.0
    %2018 = vmatpush1.msra.mxu0 0.0
    %2019 = vmatprep.subr.mxu0 0.0
    %2020 = vmatpush1.msra.mxu0 0.0
    %2021 = vmatprep.subr.mxu0 0.0
    %2022 = vmatpush1.msra.mxu0 0.0
    %2023 = vmatprep.subr.mxu0 0.0
    %2024 = vmatpush1.msra.mxu0 0.0
    %2025 = vmatprep.subr.mxu0 0.0
    %2026 = vmatpush1.msra.mxu0 0.0
    %2027 = vmatprep.subr.mxu0 0.0
    %2028 = vmatpush1.msra.mxu0 0.0
    %2029 = vmatprep.subr.mxu0 0.0
    %2030 = vmatpush1.msra.mxu0 0.0
    %2031 = vmatprep.subr.mxu0 0.0
    %2032 = vmatpush1.msra.mxu0 0.0
    %2033 = vmatprep.subr.mxu0 0.0
    %2034 = vmatpush1.msra.mxu0 0.0
    %2035 = vmatprep.subr.mxu0 0.0
    %2036 = vmatpush1.msra.mxu0 0.0
    %2037 = vmatprep.subr.mxu0 0.0
    %2038 = vmatpush1.msra.mxu0 0.0
    %2039 = vmatprep.subr.mxu0 0.0
    %2040 = vmatpush1.msra.mxu0 0.0
    %2041 = vmatprep.subr.mxu0 0.0
    %2042 = vmatpush1.msra.mxu0 0.0
    %2043 = vmatprep.subr.mxu0 0.0
    %2044 = vmatpush1.msra.mxu0 0.0
    %2045 = vmatprep.subr.mxu0 0.0
    %2046 = vmatpush1.msra.mxu0 0.0
    %2047 = vmatprep.subr.mxu0 0.0
    %2048 = vmatpush1.msra.mxu0 0.0
    %2049 = vmatprep.subr.mxu0 0.0
    %2050 = vmatpush1.msra.mxu0 0.0
    %2051 = vmatprep.subr.mxu0 0.0
    %2052 = vmatpush1.msra.mxu0 0.0
    %2053 = vmatprep.subr.mxu0 0.0
    %2054 = vmatpush1.msra.mxu0 0.0
    %2055 = vmatprep.subr.mxu0 0.0
    %2056 = vmatpush1.msra.mxu0 0.0
    %2057 = vmatprep.subr.mxu0 0.0
    %2058 = vmatpush1.msra.mxu0 0.0
    %2059 = vmatprep.subr.mxu0 0.0
    %2060 = vmatpush1.msra.mxu0 0.0
    %2061 = vmatprep.subr.mxu0 0.0
    %2062 = vmatpush1.msra.mxu0 0.0
    %2063 = vmatprep.subr.mxu0 0.0
    %2064 = vmatpush1.msra.mxu0 0.0
    %2065 = vmatprep.mubr.f32.mxu0 0.0
    %2066 = vmatmul.mubr.f32.gmra.mrb[0].mxu0 %v1996
    %v2067 = vpop.f32.mrb[0].mxu0
    %v2068 = vadd.f32 %v1994, %v2067
    %v2069 = vpop.f32.mrb[0].mxu0
    %2070 = vmatprep.mubr.f32.mxu0 0.0
    %2071 = vmatmul.mubr.f32.gmra.mrb[0].mxu0 %v1999
    %v2072 = vpop.f32.mrb[0].mxu0
    %v2073 = vadd.f32 %v1994, %v2072
    %v2074 = vpop.f32.mrb[0].mxu0
    %2075 = vdwg.mxu0
    %v2076 = vadd.f32 %v1870, %v2068
    %v2077 = vadd.f32 %v1871, %v2073
    %v2078 = vld [vmem:[%s9 + $0x11] sm:$0x1]
    %v2079 = vld [vmem:[%s9 + $0x12] sm:$0x1]
    %v2080 = vsel %vm148, %v2076, 0.0
    %2081 = vadd.xlane.f32.xlu0 %v2080
    %v2082 = vpop.xlane.xlu0 %2081
    %v2083 = vsel %vm148, %v2077, 0.0
    %2084 = vadd.xlane.f32.xlu0 %v2083
    %v2085 = vpop.xlane.xlu0 %2084
    %v2086 = vmul.f32 %v2082, %v155
    %v2087 = vmul.f32 %v2085, %v155
    %v2088 = vsub.f32 %v2076, %v2086
    %v2089 = vsub.f32 %v2077, %v2087
    %v2090 = vmul.f32 %v2088, %v2088
    %v2091 = vmul.f32 %v2089, %v2089
    %v2092 = vsel %vm148, %v2090, 0.0
    %2093 = vadd.xlane.f32.xlu0 %v2092
    %v2094 = vpop.xlane.xlu0 %2093
    %v2095 = vsel %vm148, %v2091, 0.0
    %2096 = vadd.xlane.f32.xlu0 %v2095
    %v2097 = vpop.xlane.xlu0 %2096
    %v2098 = vmul.f32 %v2094, %v155
    %v2099 = vmul.f32 %v2097, %v155
    %v2100 = vadd.f32 %v2098, 1e-12
    %v2101 = vadd.f32 %v2099, 1e-12
    %v2102 = vrsqrt.pop %v2100
    %v2103 = vrsqrt.pop %v2101
    %v2104 = vmul.f32 %v2088, %v2102
    %v2105 = vmul.f32 %v2089, %v2103
    %v2106 = vlaneseq
    %v2107 = vshrl.u32 %v2106, 7
    %v2108 = vsub.s32 0, %v2107
    %v2109 = vrot.slane %v2078, %v2108
    %v2110 = vmul.f32 %v2104, %v2109
    %v2111 = vmul.f32 %v2105, %v2109
    %v2112 = vlaneseq
    %v2113 = vshrl.u32 %v2112, 7
    %v2114 = vsub.s32 0, %v2113
    %v2115 = vrot.slane %v2079, %v2114
    %v2116 = vadd.f32 %v2110, %v2115
    %v2117 = vadd.f32 %v2111, %v2115
    %v2118 = vld [vmem:[%s8] sm:$0xff]
    %v2119 = vld [vmem:[%s8 + $0x8] sm:$0xff]
    %v2120 = vld [vmem:[%s8 + $0x10] sm:$0xff]
    %v2121 = vld [vmem:[%s8 + $0x18] sm:$0xff]
    %v2122 = vld [vmem:[%s9 + $0x2] sm:$0x1]
    %v2123 = vlaneseq
    %v2124 = vshrl.u32 %v2123, 7
    %v2125 = vsub.s32 0, %v2124
    %v2126 = vrot.slane %v2122, %v2125
    %v2128 = vsel %vm148, %v2116, 0
    %v2131 = vsel %vm148, %v2117, 0
    %2133 = vmatprep.subr.mxu0 0.0
    %2134 = vmatpush1.msra.mxu0 %v2118
    %2135 = vmatprep.subr.mxu0 0.0
    %2136 = vmatpush1.msra.mxu0 %v2119
    %2137 = vmatprep.subr.mxu0 0.0
    %2138 = vmatpush1.msra.mxu0 %v2120
    %2139 = vmatprep.subr.mxu0 0.0
    %2140 = vmatpush1.msra.mxu0 %v2121
    %2141 = vmatprep.subr.mxu0 0.0
    %2142 = vmatpush1.msra.mxu0 0.0
    %2143 = vmatprep.subr.mxu0 0.0
    %2144 = vmatpush1.msra.mxu0 0.0
    %2145 = vmatprep.subr.mxu0 0.0
    %2146 = vmatpush1.msra.mxu0 0.0
    %2147 = vmatprep.subr.mxu0 0.0
    %2148 = vmatpush1.msra.mxu0 0.0
    %2149 = vmatprep.subr.mxu0 0.0
    %2150 = vmatpush1.msra.mxu0 0.0
    %2151 = vmatprep.subr.mxu0 0.0
    %2152 = vmatpush1.msra.mxu0 0.0
    %2153 = vmatprep.subr.mxu0 0.0
    %2154 = vmatpush1.msra.mxu0 0.0
    %2155 = vmatprep.subr.mxu0 0.0
    %2156 = vmatpush1.msra.mxu0 0.0
    %2157 = vmatprep.subr.mxu0 0.0
    %2158 = vmatpush1.msra.mxu0 0.0
    %2159 = vmatprep.subr.mxu0 0.0
    %2160 = vmatpush1.msra.mxu0 0.0
    %2161 = vmatprep.subr.mxu0 0.0
    %2162 = vmatpush1.msra.mxu0 0.0
    %2163 = vmatprep.subr.mxu0 0.0
    %2164 = vmatpush1.msra.mxu0 0.0
    %2165 = vmatprep.subr.mxu0 0.0
    %2166 = vmatpush1.msra.mxu0 0.0
    %2167 = vmatprep.subr.mxu0 0.0
    %2168 = vmatpush1.msra.mxu0 0.0
    %2169 = vmatprep.subr.mxu0 0.0
    %2170 = vmatpush1.msra.mxu0 0.0
    %2171 = vmatprep.subr.mxu0 0.0
    %2172 = vmatpush1.msra.mxu0 0.0
    %2173 = vmatprep.subr.mxu0 0.0
    %2174 = vmatpush1.msra.mxu0 0.0
    %2175 = vmatprep.subr.mxu0 0.0
    %2176 = vmatpush1.msra.mxu0 0.0
    %2177 = vmatprep.subr.mxu0 0.0
    %2178 = vmatpush1.msra.mxu0 0.0
    %2179 = vmatprep.subr.mxu0 0.0
    %2180 = vmatpush1.msra.mxu0 0.0
    %2181 = vmatprep.subr.mxu0 0.0
    %2182 = vmatpush1.msra.mxu0 0.0
    %2183 = vmatprep.subr.mxu0 0.0
    %2184 = vmatpush1.msra.mxu0 0.0
    %2185 = vmatprep.subr.mxu0 0.0
    %2186 = vmatpush1.msra.mxu0 0.0
    %2187 = vmatprep.subr.mxu0 0.0
    %2188 = vmatpush1.msra.mxu0 0.0
    %2189 = vmatprep.subr.mxu0 0.0
    %2190 = vmatpush1.msra.mxu0 0.0
    %2191 = vmatprep.subr.mxu0 0.0
    %2192 = vmatpush1.msra.mxu0 0.0
    %2193 = vmatprep.subr.mxu0 0.0
    %2194 = vmatpush1.msra.mxu0 0.0
    %2195 = vmatprep.subr.mxu0 0.0
    %2196 = vmatpush1.msra.mxu0 0.0
    %2197 = vmatprep.mubr.f32.mxu0 0.0
    %2198 = vmatmul.mubr.f32.gmra.mrb[0].mxu0 %v2128
    %v2199 = vpop.f32.mrb[0].mxu0
    %v2200 = vadd.f32 %v2126, %v2199
    %v2201 = vpop.f32.mrb[0].mxu0
    %2202 = vmatprep.mubr.f32.mxu0 0.0
    %2203 = vmatmul.mubr.f32.gmra.mrb[0].mxu0 %v2131
    %v2204 = vpop.f32.mrb[0].mxu0
    %v2205 = vadd.f32 %v2126, %v2204
    %v2206 = vpop.f32.mrb[0].mxu0
    %2207 = vdwg.mxu0
    %v2208 = vtanh.pop %v2200
    %v2209 = vtanh.pop %v2205
    %v2210 = vmul.f32 %v2208, %v2209
    %v2211 = vsel %vm78, %v2210, 0.0
    %2212 = vadd.xlane.f32.xlu0 %v2211
    %v2213 = vpop.xlane.xlu0 %2212
    %v2214 = vmul.f32 %v2208, %v2208
    %v2215 = vsel %vm78, %v2214, 0.0
    %2216 = vadd.xlane.f32.xlu0 %v2215
    %v2217 = vpop.xlane.xlu0 %2216
    %v2218 = vrsqrt.pop %v2217
    %v2219 = vmul.f32 %v2217, %v2218
    %vm2220 = vcmp.eq.f32.partialorder %v2217, inf
    %v2221 = vsel %vm2220, %v2217, %v2219
    %vm2222 = vcmp.eq.f32.partialorder %v2217, 0.0
    %v2223 = vand.u32 %v2217, 2147483648
    %v2224 = vsel %vm2222, %v2223, %v2221
    %v2225 = vmul.f32 %v2209, %v2209
    %v2226 = vsel %vm78, %v2225, 0.0
    %2227 = vadd.xlane.f32.xlu0 %v2226
    %v2228 = vpop.xlane.xlu0 %2227
    %v2229 = vrsqrt.pop %v2228
    %v2230 = vmul.f32 %v2228, %v2229
    %vm2231 = vcmp.eq.f32.partialorder %v2228, inf
    %v2232 = vsel %vm2231, %v2228, %v2230
    %vm2233 = vcmp.eq.f32.partialorder %v2228, 0.0
    %v2234 = vand.u32 %v2228, 2147483648
    %v2235 = vsel %vm2233, %v2234, %v2232
    %v2236 = vmul.f32 %v2224, %v2235
    %v2237 = vmax.f32 %v2236, 1e-08
    %v2238 = vrcp.pop %v2237
    %v2239 = vmul.f32 %v2213, %v2238
    %vm2240 = vcmask 0
    %2241 = vst.msk [vmem:[#allocation10] sm:$0x1] %vm2240, %v2239
    // Predicated region
    $region54: #{text_similarity.1} parent=1 // pred_check
      _
    $region55: #{text_similarity.1} parent=1 // pred_check_branch
      %2243 = sbr.rel (0) target = $region57
    $region56: #{text_similarity.1} parent=1 // pred_region
      %s2245 = ssub.s32 16, 16
      %2246 = vsyncadd [#allocation5], %s2245
      %s2248 = sshll.u32 [#allocation10], 4
      %s2249 = int_to_ptr.vmem [resolvable:$true] %s2248
      %2251 = dma.vmem_to_hbm [thread:$0]  %s2249, 16, %s10, [#allocation5]
    $region57: #{text_similarity.1} parent=1 // pred_fallthru
      _
    // Predicated region
    $region58: #{text_similarity.1} parent=1 // pred_check
      _
    $region59: #{text_similarity.1} parent=1 // pred_check_branch
      %2253 = sbr.rel (0) target = $region61
    $region60: #{text_similarity.1} parent=1 // pred_region
      %2254 = dma.done [#allocation5], 16
    $region61: #{text_similarity.1} parent=1 // pred_fallthru
      _
    %2255 = vsyncpa [#allocation4], 1
    %2256 = vsyncpa [#allocation5], 1
    %2257 = vsyncpa [#allocation6], 1
    %2258 = vsyncpa [#allocation8], 1

</llo_original>
